<compile_context>
chip_gen: v7x
topology: tpu7x:2x2x1
jax: 0.10.0
libtpu: 0.0.40
codegen_flags: <defaults>
</compile_context>

<pallas_src>
import functools

import jax
import jax.numpy as jnp
from jax.experimental import pallas as pl
from jax.experimental.pallas import tpu as pltpu


def _round_up(x, m):
    return ((x + m - 1) // m) * m


def _matvec(w, x):
    """(O, I) @ (I, T) with I, O <= 8, as unrolled VPU broadcast-MACs.

    Keeps the tiny contraction off the MXU (where f32 inputs would force a
    multi-pass bf16 decomposition at <1% utilization); this is ~15 VALU ops per
    128 pixels per layer plus cheap lane/sublane broadcasts.
    """
    acc = w[:, 0:1] * x[0:1, :]
    for k in range(1, w.shape[1]):
        acc = acc + w[:, k:k + 1] * x[k:k + 1, :]
    return acc


def _cppn_kernel(loc_ref, lat_ref, w0l_ref, w0z_ref, b0_ref, wh_ref, wout_ref,
                 o_ref, *, act_dtype):
    """One lane-dense slab of pixels; features on sublanes, pixels on lanes.

    loc_ref  : (D_loc, T)   location features for this tile
    lat_ref  : (D_lat, T)   latent features for this tile
    w0l_ref  : (H, D_loc)   input-layer weight, location part (PyTorch (out, in))
    w0z_ref  : (H, D_lat)   input-layer weight, latent part
    b0_ref   : (H, 1)       input-layer bias (broadcast over lanes)
    wh_ref   : (L, H, H)    stacked hidden-layer weights (out, in)
    wout_ref : (D_out, H)   output-layer weight
    o_ref    : (D_out, T)   sigmoid output (lane-dense store)
    """
    def act(x):
        # tanh on the EUP; optionally packed bf16 on v6e/v7x (~2x EUP throughput).
        return jnp.tanh(x.astype(act_dtype)).astype(jnp.float32)

    # Input layer: fused concat == two small mat-vecs + bias.
    h = (_matvec(w0l_ref[...], loc_ref[...])
         + _matvec(w0z_ref[...], lat_ref[...])
         + b0_ref[...])
    h = act(h)

    # Hidden layers (L known at trace time -> statically unrolled).
    wh = wh_ref[...]
    for i in range(wh.shape[0]):
        h = act(_matvec(wh[i], h))

    # Output layer + exact sigmoid via a single f32 EUP tanh:
    #   sigmoid(x) = 0.5 * tanh(0.5 * x) + 0.5
    logits = _matvec(wout_ref[...], h)
    o_ref[...] = 0.5 * jnp.tanh(0.5 * logits) + 0.5


def cppn_forward_t(loc_t, latent_t, params, *, tile_n=8192,
                   activation_dtype=jnp.float32):
    """Feature-major fast path: loc_t (D_loc, N), latent_t (D_lat, N) -> (D_out, N).

    No wrapper-side transposes or pads: the partial final block is handled by
    Pallas block masking, so the only HBM traffic is the kernel's own
    ~36 B/pixel.  `activation_dtype=jnp.bfloat16` is a v6e/v7x-only knob
    (v5e has no bf16 VPU/EUP path).
    """
    w0, b0, wh, wout = params
    d_loc, n = loc_t.shape
    d_lat = latent_t.shape[0]
    h_dim, d_in = w0.shape
    d_out = wout.shape[0]
    num_hidden = wh.shape[0]
    assert d_in == d_loc + d_lat, (d_in, d_loc, d_lat)
    assert latent_t.shape[1] == n

    # Split the input-layer weight into loc / latent parts (concat fused in-kernel).
    w0l = w0[:, :d_loc].astype(jnp.float32)
    w0z = w0[:, d_loc:].astype(jnp.float32)
    b0c = b0.reshape(h_dim, 1).astype(jnp.float32)
    wh_f = wh.astype(jnp.float32)
    wout_f = wout.astype(jnp.float32)

    # Tile selection: lane-dense (multiple of 128), big enough to amortize the
    # ~0.35us grid-step overhead, small enough to keep VMEM tiny on every
    # generation (v5e 16 MiB default scoped VMEM, v7x 64 MiB physical).
    tile = max(128, min(_round_up(int(tile_n), 128), _round_up(n, 128)))
    # Guarantee >= 2 grid steps whenever possible so the "parallel" axis can be
    # sharded across both TensorCores on v7x (harmless on single-TC v5e/v6e).
    if pl.cdiv(n, tile) < 2 and n > 128:
        tile = max(128, _round_up(pl.cdiv(n, 2), 128))
    n_steps = pl.cdiv(n, tile)

    flops_per_px = (2 * h_dim * (d_loc + d_lat) + h_dim
                    + 2 * num_hidden * h_dim * h_dim + 2 * d_out * h_dim)
    trans_per_px = (1 + num_hidden) * h_dim + d_out
    bytes_per_px = 4 * (d_loc + d_lat + d_out)

    kernel = functools.partial(_cppn_kernel, act_dtype=activation_dtype)

    out_t = pl.pallas_call(
        kernel,
        out_shape=jax.ShapeDtypeStruct((d_out, n), jnp.float32),
        grid_spec=pltpu.PrefetchScalarGridSpec(
            num_scalar_prefetch=0,
            grid=(n_steps,),
            in_specs=[
                pl.BlockSpec((d_loc, tile), lambda i: (0, i)),       # pipelined over N
                pl.BlockSpec((d_lat, tile), lambda i: (0, i)),       # pipelined over N
                pl.BlockSpec((h_dim, d_loc), lambda i: (0, 0)),      # weights stay resident
                pl.BlockSpec((h_dim, d_lat), lambda i: (0, 0)),
                pl.BlockSpec((h_dim, 1), lambda i: (0, 0)),
                pl.BlockSpec((num_hidden, h_dim, h_dim), lambda i: (0, 0, 0)),
                pl.BlockSpec((d_out, h_dim), lambda i: (0, 0)),
            ],
            out_specs=pl.BlockSpec((d_out, tile), lambda i: (0, i)),  # lane-dense stores
        ),
        compiler_params=pltpu.CompilerParams(
            dimension_semantics=("parallel",),                        # megacore on v7x
        ),
        cost_estimate=pl.CostEstimate(
            flops=flops_per_px * n,
            transcendentals=trans_per_px * n,
            bytes_accessed=bytes_per_px * n,
        ),
    )(loc_t.astype(jnp.float32), latent_t.astype(jnp.float32),
      w0l, w0z, b0c, wh_f, wout_f)
    return out_t


def cppn_forward(loc_vec, latent_vec, params, **kwargs):
    """PyTorch-convention entry point matching Net.forward:
    sigmoid(MLP(cat([loc_vec, latent_vec], dim=1))) with (N, D) in / (N, D_out) out.

    The (N, D) <-> (D, N) transposes here are extra HBM round trips; callers that
    can keep pixel data feature-major should call `cppn_forward_t` directly.
    """
    out_t = cppn_forward_t(jnp.transpose(loc_vec), jnp.transpose(latent_vec),
                           params, **kwargs)
    return jnp.transpose(out_t)


def init_params(key,
                num_hidden_layers=4,
                num_neurons=8,
                latent_len=3,
                include_bias=True,
                include_dist_to_origin=True,
                rgb=True):
    """Parameter init mirroring Net.__init__ / init_weights, PyTorch (out, in) layout.

    Linear weights ~ N(0, 1) (as in `_init_weights`); the input-layer bias keeps a
    small uniform init (PyTorch's default bias init is untouched by `_init_weights`).
    """
    d_in = (3 if include_dist_to_origin else 2) + latent_len
    d_out = 3 if rgb else 1
    k0, kb, kh, ko = jax.random.split(key, 4)

    w0 = jax.random.normal(k0, (num_neurons, d_in), dtype=jnp.float32)
    if include_bias:
        bound = 1.0 / jnp.sqrt(jnp.float32(d_in))
        b0 = jax.random.uniform(kb, (num_neurons,), dtype=jnp.float32,
                                minval=-bound, maxval=bound)
    else:
        b0 = jnp.zeros((num_neurons,), dtype=jnp.float32)
    wh = jax.random.normal(kh, (num_hidden_layers, num_neurons, num_neurons),
                           dtype=jnp.float32)
    wout = jax.random.normal(ko, (d_out, num_neurons), dtype=jnp.float32)
    return (w0, b0, wh, wout)


def reference_forward(loc_vec, latent_vec, params):
    """Pure-JAX reference matching the PyTorch module exactly."""
    w0, b0, wh, wout = params
    x = jnp.concatenate([loc_vec, latent_vec], axis=1).astype(jnp.float32)
    h = jnp.tanh(x @ w0.T + b0)
    for i in range(wh.shape[0]):
        h = jnp.tanh(h @ wh[i].T)
    return jax.nn.sigmoid(h @ wout.T)


if __name__ == "__main__":
    key = jax.random.PRNGKey(0)
    k_params, k_loc, k_lat = jax.random.split(key, 3)

    # Non-multiple-of-128 pixel count exercises the masked partial block; the
    # auto tile split yields a 2-step grid so the pipeline (and v7x megacore
    # sharding) is exercised too.
    N = 1000
    latent_len = 3
    params = init_params(k_params,
                         num_hidden_layers=4,
                         num_neurons=8,
                         latent_len=latent_len,
                         include_bias=True,
                         include_dist_to_origin=True,
                         rgb=True)

    loc_vec = jax.random.uniform(k_loc, (N, 3), dtype=jnp.float32,
                                 minval=-1.0, maxval=1.0)
    latent_vec = jax.random.normal(k_lat, (N, latent_len), dtype=jnp.float32)

    out = cppn_forward(loc_vec, latent_vec, params)
    out = jax.block_until_ready(out)

    ref = reference_forward(loc_vec, latent_vec, params)
    assert out.shape == (N, 3), out.shape
    assert out.dtype == jnp.float32
    # All math is f32 and the sigmoid identity is exact; remaining differences are
    # only summation order / hardware-tanh rounding through 5 tanh layers.
    assert jnp.allclose(out, ref, atol=1e-3, rtol=1e-3), "mismatch vs reference"

    print("KERNEL_OK")
</pallas_src>

<mosaic_0001>
module attributes {stable_mosaic.version = 11 : i64} {
  func.func @_cppn_kernel(%arg0: i32, %arg1: memref<3x512xf32, #tpu.memory_space<vmem>>, %arg2: memref<3x512xf32, #tpu.memory_space<vmem>>, %arg3: memref<8x3xf32, #tpu.memory_space<vmem>>, %arg4: memref<8x3xf32, #tpu.memory_space<vmem>>, %arg5: memref<8x1xf32, #tpu.memory_space<vmem>>, %arg6: memref<4x8x8xf32, #tpu.memory_space<vmem>>, %arg7: memref<3x8xf32, #tpu.memory_space<vmem>>, %arg8: memref<3x512xf32, #tpu.memory_space<vmem>>) attributes {dimension_semantics = [#tpu.dimension_semantics<parallel>], iteration_bounds = array<i64: 2>, scalar_prefetch = 0 : i64, scratch_operands = 0 : i64, tpu.core_type = #tpu.core_type<tc>, window_params = [{transform_indices = @transform_0, window_bounds = array<i64: 3, 512>}, {transform_indices = @transform_1, window_bounds = array<i64: 3, 512>}, {pipeline_mode = #tpu.pipeline_mode<synchronous>, transform_indices = @transform_2, window_bounds = array<i64: 8, 3>}, {pipeline_mode = #tpu.pipeline_mode<synchronous>, transform_indices = @transform_3, window_bounds = array<i64: 8, 3>}, {pipeline_mode = #tpu.pipeline_mode<synchronous>, transform_indices = @transform_4, window_bounds = array<i64: 8, 1>}, {pipeline_mode = #tpu.pipeline_mode<synchronous>, transform_indices = @transform_5, window_bounds = array<i64: 4, 8, 8>}, {pipeline_mode = #tpu.pipeline_mode<synchronous>, transform_indices = @transform_6, window_bounds = array<i64: 3, 8>}, {transform_indices = @transform_7, window_bounds = array<i64: 3, 512>}]} {
    %c0 = arith.constant 0 : index
    %c0_0 = arith.constant 0 : index
    %0 = vector.load %arg3[%c0, %c0_0] : memref<8x3xf32, #tpu.memory_space<vmem>>, vector<8x3xf32>
    %c0_1 = arith.constant 0 : index
    %c0_2 = arith.constant 0 : index
    %1 = vector.load %arg1[%c0_1, %c0_2] : memref<3x512xf32, #tpu.memory_space<vmem>>, vector<3x512xf32>
    %2 = vector.extract_strided_slice %0 {offsets = [0, 0], sizes = [8, 1], strides = [1, 1]} : vector<8x3xf32> to vector<8x1xf32>
    %3 = vector.extract_strided_slice %1 {offsets = [0, 0], sizes = [1, 512], strides = [1, 1]} : vector<3x512xf32> to vector<1x512xf32>
    %4 = vector.broadcast %2 : vector<8x1xf32> to vector<8x512xf32>
    %5 = vector.broadcast %3 : vector<1x512xf32> to vector<8x512xf32>
    %6 = arith.mulf %4, %5 : vector<8x512xf32>
    %7 = vector.extract_strided_slice %0 {offsets = [0, 1], sizes = [8, 1], strides = [1, 1]} : vector<8x3xf32> to vector<8x1xf32>
    %8 = vector.extract_strided_slice %1 {offsets = [1, 0], sizes = [1, 512], strides = [1, 1]} : vector<3x512xf32> to vector<1x512xf32>
    %9 = vector.broadcast %7 : vector<8x1xf32> to vector<8x512xf32>
    %10 = vector.broadcast %8 : vector<1x512xf32> to vector<8x512xf32>
    %11 = arith.mulf %9, %10 : vector<8x512xf32>
    %12 = arith.addf %6, %11 : vector<8x512xf32>
    %13 = vector.extract_strided_slice %0 {offsets = [0, 2], sizes = [8, 1], strides = [1, 1]} : vector<8x3xf32> to vector<8x1xf32>
    %14 = vector.extract_strided_slice %1 {offsets = [2, 0], sizes = [1, 512], strides = [1, 1]} : vector<3x512xf32> to vector<1x512xf32>
    %15 = vector.broadcast %13 : vector<8x1xf32> to vector<8x512xf32>
    %16 = vector.broadcast %14 : vector<1x512xf32> to vector<8x512xf32>
    %17 = arith.mulf %15, %16 : vector<8x512xf32>
    %18 = arith.addf %12, %17 : vector<8x512xf32>
    %c0_3 = arith.constant 0 : index
    %c0_4 = arith.constant 0 : index
    %19 = vector.load %arg4[%c0_3, %c0_4] : memref<8x3xf32, #tpu.memory_space<vmem>>, vector<8x3xf32>
    %c0_5 = arith.constant 0 : index
    %c0_6 = arith.constant 0 : index
    %20 = vector.load %arg2[%c0_5, %c0_6] : memref<3x512xf32, #tpu.memory_space<vmem>>, vector<3x512xf32>
    %21 = vector.extract_strided_slice %19 {offsets = [0, 0], sizes = [8, 1], strides = [1, 1]} : vector<8x3xf32> to vector<8x1xf32>
    %22 = vector.extract_strided_slice %20 {offsets = [0, 0], sizes = [1, 512], strides = [1, 1]} : vector<3x512xf32> to vector<1x512xf32>
    %23 = vector.broadcast %21 : vector<8x1xf32> to vector<8x512xf32>
    %24 = vector.broadcast %22 : vector<1x512xf32> to vector<8x512xf32>
    %25 = arith.mulf %23, %24 : vector<8x512xf32>
    %26 = vector.extract_strided_slice %19 {offsets = [0, 1], sizes = [8, 1], strides = [1, 1]} : vector<8x3xf32> to vector<8x1xf32>
    %27 = vector.extract_strided_slice %20 {offsets = [1, 0], sizes = [1, 512], strides = [1, 1]} : vector<3x512xf32> to vector<1x512xf32>
    %28 = vector.broadcast %26 : vector<8x1xf32> to vector<8x512xf32>
    %29 = vector.broadcast %27 : vector<1x512xf32> to vector<8x512xf32>
    %30 = arith.mulf %28, %29 : vector<8x512xf32>
    %31 = arith.addf %25, %30 : vector<8x512xf32>
    %32 = vector.extract_strided_slice %19 {offsets = [0, 2], sizes = [8, 1], strides = [1, 1]} : vector<8x3xf32> to vector<8x1xf32>
    %33 = vector.extract_strided_slice %20 {offsets = [2, 0], sizes = [1, 512], strides = [1, 1]} : vector<3x512xf32> to vector<1x512xf32>
    %34 = vector.broadcast %32 : vector<8x1xf32> to vector<8x512xf32>
    %35 = vector.broadcast %33 : vector<1x512xf32> to vector<8x512xf32>
    %36 = arith.mulf %34, %35 : vector<8x512xf32>
    %37 = arith.addf %31, %36 : vector<8x512xf32>
    %38 = arith.addf %18, %37 : vector<8x512xf32>
    %c0_7 = arith.constant 0 : index
    %c0_8 = arith.constant 0 : index
    %39 = vector.load %arg5[%c0_7, %c0_8] : memref<8x1xf32, #tpu.memory_space<vmem>>, vector<8x1xf32>
    %40 = vector.broadcast %39 : vector<8x1xf32> to vector<8x512xf32>
    %41 = arith.addf %38, %40 : vector<8x512xf32>
    %42 = math.tanh %41 : vector<8x512xf32>
    %c0_9 = arith.constant 0 : index
    %c0_10 = arith.constant 0 : index
    %c0_11 = arith.constant 0 : index
    %43 = vector.load %arg6[%c0_9, %c0_10, %c0_11] : memref<4x8x8xf32, #tpu.memory_space<vmem>>, vector<4x8x8xf32>
    %44 = vector.extract_strided_slice %43 {offsets = [0, 0, 0], sizes = [1, 8, 8], strides = [1, 1, 1]} : vector<4x8x8xf32> to vector<1x8x8xf32>
    %45 = vector.shape_cast %44 : vector<1x8x8xf32> to vector<8x8xf32>
    %46 = vector.extract_strided_slice %45 {offsets = [0, 0], sizes = [8, 1], strides = [1, 1]} : vector<8x8xf32> to vector<8x1xf32>
    %47 = vector.extract_strided_slice %42 {offsets = [0, 0], sizes = [1, 512], strides = [1, 1]} : vector<8x512xf32> to vector<1x512xf32>
    %48 = vector.broadcast %46 : vector<8x1xf32> to vector<8x512xf32>
    %49 = vector.broadcast %47 : vector<1x512xf32> to vector<8x512xf32>
    %50 = arith.mulf %48, %49 : vector<8x512xf32>
    %51 = vector.extract_strided_slice %45 {offsets = [0, 1], sizes = [8, 1], strides = [1, 1]} : vector<8x8xf32> to vector<8x1xf32>
    %52 = vector.extract_strided_slice %42 {offsets = [1, 0], sizes = [1, 512], strides = [1, 1]} : vector<8x512xf32> to vector<1x512xf32>
    %53 = vector.broadcast %51 : vector<8x1xf32> to vector<8x512xf32>
    %54 = vector.broadcast %52 : vector<1x512xf32> to vector<8x512xf32>
    %55 = arith.mulf %53, %54 : vector<8x512xf32>
    %56 = arith.addf %50, %55 : vector<8x512xf32>
    %57 = vector.extract_strided_slice %45 {offsets = [0, 2], sizes = [8, 1], strides = [1, 1]} : vector<8x8xf32> to vector<8x1xf32>
    %58 = vector.extract_strided_slice %42 {offsets = [2, 0], sizes = [1, 512], strides = [1, 1]} : vector<8x512xf32> to vector<1x512xf32>
    %59 = vector.broadcast %57 : vector<8x1xf32> to vector<8x512xf32>
    %60 = vector.broadcast %58 : vector<1x512xf32> to vector<8x512xf32>
    %61 = arith.mulf %59, %60 : vector<8x512xf32>
    %62 = arith.addf %56, %61 : vector<8x512xf32>
    %63 = vector.extract_strided_slice %45 {offsets = [0, 3], sizes = [8, 1], strides = [1, 1]} : vector<8x8xf32> to vector<8x1xf32>
    %64 = vector.extract_strided_slice %42 {offsets = [3, 0], sizes = [1, 512], strides = [1, 1]} : vector<8x512xf32> to vector<1x512xf32>
    %65 = vector.broadcast %63 : vector<8x1xf32> to vector<8x512xf32>
    %66 = vector.broadcast %64 : vector<1x512xf32> to vector<8x512xf32>
    %67 = arith.mulf %65, %66 : vector<8x512xf32>
    %68 = arith.addf %62, %67 : vector<8x512xf32>
    %69 = vector.extract_strided_slice %45 {offsets = [0, 4], sizes = [8, 1], strides = [1, 1]} : vector<8x8xf32> to vector<8x1xf32>
    %70 = vector.extract_strided_slice %42 {offsets = [4, 0], sizes = [1, 512], strides = [1, 1]} : vector<8x512xf32> to vector<1x512xf32>
    %71 = vector.broadcast %69 : vector<8x1xf32> to vector<8x512xf32>
    %72 = vector.broadcast %70 : vector<1x512xf32> to vector<8x512xf32>
    %73 = arith.mulf %71, %72 : vector<8x512xf32>
    %74 = arith.addf %68, %73 : vector<8x512xf32>
    %75 = vector.extract_strided_slice %45 {offsets = [0, 5], sizes = [8, 1], strides = [1, 1]} : vector<8x8xf32> to vector<8x1xf32>
    %76 = vector.extract_strided_slice %42 {offsets = [5, 0], sizes = [1, 512], strides = [1, 1]} : vector<8x512xf32> to vector<1x512xf32>
    %77 = vector.broadcast %75 : vector<8x1xf32> to vector<8x512xf32>
    %78 = vector.broadcast %76 : vector<1x512xf32> to vector<8x512xf32>
    %79 = arith.mulf %77, %78 : vector<8x512xf32>
    %80 = arith.addf %74, %79 : vector<8x512xf32>
    %81 = vector.extract_strided_slice %45 {offsets = [0, 6], sizes = [8, 1], strides = [1, 1]} : vector<8x8xf32> to vector<8x1xf32>
    %82 = vector.extract_strided_slice %42 {offsets = [6, 0], sizes = [1, 512], strides = [1, 1]} : vector<8x512xf32> to vector<1x512xf32>
    %83 = vector.broadcast %81 : vector<8x1xf32> to vector<8x512xf32>
    %84 = vector.broadcast %82 : vector<1x512xf32> to vector<8x512xf32>
    %85 = arith.mulf %83, %84 : vector<8x512xf32>
    %86 = arith.addf %80, %85 : vector<8x512xf32>
    %87 = vector.extract_strided_slice %45 {offsets = [0, 7], sizes = [8, 1], strides = [1, 1]} : vector<8x8xf32> to vector<8x1xf32>
    %88 = vector.extract_strided_slice %42 {offsets = [7, 0], sizes = [1, 512], strides = [1, 1]} : vector<8x512xf32> to vector<1x512xf32>
    %89 = vector.broadcast %87 : vector<8x1xf32> to vector<8x512xf32>
    %90 = vector.broadcast %88 : vector<1x512xf32> to vector<8x512xf32>
    %91 = arith.mulf %89, %90 : vector<8x512xf32>
    %92 = arith.addf %86, %91 : vector<8x512xf32>
    %93 = math.tanh %92 : vector<8x512xf32>
    %94 = vector.extract_strided_slice %43 {offsets = [1, 0, 0], sizes = [1, 8, 8], strides = [1, 1, 1]} : vector<4x8x8xf32> to vector<1x8x8xf32>
    %95 = vector.shape_cast %94 : vector<1x8x8xf32> to vector<8x8xf32>
    %96 = vector.extract_strided_slice %95 {offsets = [0, 0], sizes = [8, 1], strides = [1, 1]} : vector<8x8xf32> to vector<8x1xf32>
    %97 = vector.extract_strided_slice %93 {offsets = [0, 0], sizes = [1, 512], strides = [1, 1]} : vector<8x512xf32> to vector<1x512xf32>
    %98 = vector.broadcast %96 : vector<8x1xf32> to vector<8x512xf32>
    %99 = vector.broadcast %97 : vector<1x512xf32> to vector<8x512xf32>
    %100 = arith.mulf %98, %99 : vector<8x512xf32>
    %101 = vector.extract_strided_slice %95 {offsets = [0, 1], sizes = [8, 1], strides = [1, 1]} : vector<8x8xf32> to vector<8x1xf32>
    %102 = vector.extract_strided_slice %93 {offsets = [1, 0], sizes = [1, 512], strides = [1, 1]} : vector<8x512xf32> to vector<1x512xf32>
    %103 = vector.broadcast %101 : vector<8x1xf32> to vector<8x512xf32>
    %104 = vector.broadcast %102 : vector<1x512xf32> to vector<8x512xf32>
    %105 = arith.mulf %103, %104 : vector<8x512xf32>
    %106 = arith.addf %100, %105 : vector<8x512xf32>
    %107 = vector.extract_strided_slice %95 {offsets = [0, 2], sizes = [8, 1], strides = [1, 1]} : vector<8x8xf32> to vector<8x1xf32>
    %108 = vector.extract_strided_slice %93 {offsets = [2, 0], sizes = [1, 512], strides = [1, 1]} : vector<8x512xf32> to vector<1x512xf32>
    %109 = vector.broadcast %107 : vector<8x1xf32> to vector<8x512xf32>
    %110 = vector.broadcast %108 : vector<1x512xf32> to vector<8x512xf32>
    %111 = arith.mulf %109, %110 : vector<8x512xf32>
    %112 = arith.addf %106, %111 : vector<8x512xf32>
    %113 = vector.extract_strided_slice %95 {offsets = [0, 3], sizes = [8, 1], strides = [1, 1]} : vector<8x8xf32> to vector<8x1xf32>
    %114 = vector.extract_strided_slice %93 {offsets = [3, 0], sizes = [1, 512], strides = [1, 1]} : vector<8x512xf32> to vector<1x512xf32>
    %115 = vector.broadcast %113 : vector<8x1xf32> to vector<8x512xf32>
    %116 = vector.broadcast %114 : vector<1x512xf32> to vector<8x512xf32>
    %117 = arith.mulf %115, %116 : vector<8x512xf32>
    %118 = arith.addf %112, %117 : vector<8x512xf32>
    %119 = vector.extract_strided_slice %95 {offsets = [0, 4], sizes = [8, 1], strides = [1, 1]} : vector<8x8xf32> to vector<8x1xf32>
    %120 = vector.extract_strided_slice %93 {offsets = [4, 0], sizes = [1, 512], strides = [1, 1]} : vector<8x512xf32> to vector<1x512xf32>
    %121 = vector.broadcast %119 : vector<8x1xf32> to vector<8x512xf32>
    %122 = vector.broadcast %120 : vector<1x512xf32> to vector<8x512xf32>
    %123 = arith.mulf %121, %122 : vector<8x512xf32>
    %124 = arith.addf %118, %123 : vector<8x512xf32>
    %125 = vector.extract_strided_slice %95 {offsets = [0, 5], sizes = [8, 1], strides = [1, 1]} : vector<8x8xf32> to vector<8x1xf32>
    %126 = vector.extract_strided_slice %93 {offsets = [5, 0], sizes = [1, 512], strides = [1, 1]} : vector<8x512xf32> to vector<1x512xf32>
    %127 = vector.broadcast %125 : vector<8x1xf32> to vector<8x512xf32>
    %128 = vector.broadcast %126 : vector<1x512xf32> to vector<8x512xf32>
    %129 = arith.mulf %127, %128 : vector<8x512xf32>
    %130 = arith.addf %124, %129 : vector<8x512xf32>
    %131 = vector.extract_strided_slice %95 {offsets = [0, 6], sizes = [8, 1], strides = [1, 1]} : vector<8x8xf32> to vector<8x1xf32>
    %132 = vector.extract_strided_slice %93 {offsets = [6, 0], sizes = [1, 512], strides = [1, 1]} : vector<8x512xf32> to vector<1x512xf32>
    %133 = vector.broadcast %131 : vector<8x1xf32> to vector<8x512xf32>
    %134 = vector.broadcast %132 : vector<1x512xf32> to vector<8x512xf32>
    %135 = arith.mulf %133, %134 : vector<8x512xf32>
    %136 = arith.addf %130, %135 : vector<8x512xf32>
    %137 = vector.extract_strided_slice %95 {offsets = [0, 7], sizes = [8, 1], strides = [1, 1]} : vector<8x8xf32> to vector<8x1xf32>
    %138 = vector.extract_strided_slice %93 {offsets = [7, 0], sizes = [1, 512], strides = [1, 1]} : vector<8x512xf32> to vector<1x512xf32>
    %139 = vector.broadcast %137 : vector<8x1xf32> to vector<8x512xf32>
    %140 = vector.broadcast %138 : vector<1x512xf32> to vector<8x512xf32>
    %141 = arith.mulf %139, %140 : vector<8x512xf32>
    %142 = arith.addf %136, %141 : vector<8x512xf32>
    %143 = math.tanh %142 : vector<8x512xf32>
    %144 = vector.extract_strided_slice %43 {offsets = [2, 0, 0], sizes = [1, 8, 8], strides = [1, 1, 1]} : vector<4x8x8xf32> to vector<1x8x8xf32>
    %145 = vector.shape_cast %144 : vector<1x8x8xf32> to vector<8x8xf32>
    %146 = vector.extract_strided_slice %145 {offsets = [0, 0], sizes = [8, 1], strides = [1, 1]} : vector<8x8xf32> to vector<8x1xf32>
    %147 = vector.extract_strided_slice %143 {offsets = [0, 0], sizes = [1, 512], strides = [1, 1]} : vector<8x512xf32> to vector<1x512xf32>
    %148 = vector.broadcast %146 : vector<8x1xf32> to vector<8x512xf32>
    %149 = vector.broadcast %147 : vector<1x512xf32> to vector<8x512xf32>
    %150 = arith.mulf %148, %149 : vector<8x512xf32>
    %151 = vector.extract_strided_slice %145 {offsets = [0, 1], sizes = [8, 1], strides = [1, 1]} : vector<8x8xf32> to vector<8x1xf32>
    %152 = vector.extract_strided_slice %143 {offsets = [1, 0], sizes = [1, 512], strides = [1, 1]} : vector<8x512xf32> to vector<1x512xf32>
    %153 = vector.broadcast %151 : vector<8x1xf32> to vector<8x512xf32>
    %154 = vector.broadcast %152 : vector<1x512xf32> to vector<8x512xf32>
    %155 = arith.mulf %153, %154 : vector<8x512xf32>
    %156 = arith.addf %150, %155 : vector<8x512xf32>
    %157 = vector.extract_strided_slice %145 {offsets = [0, 2], sizes = [8, 1], strides = [1, 1]} : vector<8x8xf32> to vector<8x1xf32>
    %158 = vector.extract_strided_slice %143 {offsets = [2, 0], sizes = [1, 512], strides = [1, 1]} : vector<8x512xf32> to vector<1x512xf32>
    %159 = vector.broadcast %157 : vector<8x1xf32> to vector<8x512xf32>
    %160 = vector.broadcast %158 : vector<1x512xf32> to vector<8x512xf32>
    %161 = arith.mulf %159, %160 : vector<8x512xf32>
    %162 = arith.addf %156, %161 : vector<8x512xf32>
    %163 = vector.extract_strided_slice %145 {offsets = [0, 3], sizes = [8, 1], strides = [1, 1]} : vector<8x8xf32> to vector<8x1xf32>
    %164 = vector.extract_strided_slice %143 {offsets = [3, 0], sizes = [1, 512], strides = [1, 1]} : vector<8x512xf32> to vector<1x512xf32>
    %165 = vector.broadcast %163 : vector<8x1xf32> to vector<8x512xf32>
    %166 = vector.broadcast %164 : vector<1x512xf32> to vector<8x512xf32>
    %167 = arith.mulf %165, %166 : vector<8x512xf32>
    %168 = arith.addf %162, %167 : vector<8x512xf32>
    %169 = vector.extract_strided_slice %145 {offsets = [0, 4], sizes = [8, 1], strides = [1, 1]} : vector<8x8xf32> to vector<8x1xf32>
    %170 = vector.extract_strided_slice %143 {offsets = [4, 0], sizes = [1, 512], strides = [1, 1]} : vector<8x512xf32> to vector<1x512xf32>
    %171 = vector.broadcast %169 : vector<8x1xf32> to vector<8x512xf32>
    %172 = vector.broadcast %170 : vector<1x512xf32> to vector<8x512xf32>
    %173 = arith.mulf %171, %172 : vector<8x512xf32>
    %174 = arith.addf %168, %173 : vector<8x512xf32>
    %175 = vector.extract_strided_slice %145 {offsets = [0, 5], sizes = [8, 1], strides = [1, 1]} : vector<8x8xf32> to vector<8x1xf32>
    %176 = vector.extract_strided_slice %143 {offsets = [5, 0], sizes = [1, 512], strides = [1, 1]} : vector<8x512xf32> to vector<1x512xf32>
    %177 = vector.broadcast %175 : vector<8x1xf32> to vector<8x512xf32>
    %178 = vector.broadcast %176 : vector<1x512xf32> to vector<8x512xf32>
    %179 = arith.mulf %177, %178 : vector<8x512xf32>
    %180 = arith.addf %174, %179 : vector<8x512xf32>
    %181 = vector.extract_strided_slice %145 {offsets = [0, 6], sizes = [8, 1], strides = [1, 1]} : vector<8x8xf32> to vector<8x1xf32>
    %182 = vector.extract_strided_slice %143 {offsets = [6, 0], sizes = [1, 512], strides = [1, 1]} : vector<8x512xf32> to vector<1x512xf32>
    %183 = vector.broadcast %181 : vector<8x1xf32> to vector<8x512xf32>
    %184 = vector.broadcast %182 : vector<1x512xf32> to vector<8x512xf32>
    %185 = arith.mulf %183, %184 : vector<8x512xf32>
    %186 = arith.addf %180, %185 : vector<8x512xf32>
    %187 = vector.extract_strided_slice %145 {offsets = [0, 7], sizes = [8, 1], strides = [1, 1]} : vector<8x8xf32> to vector<8x1xf32>
    %188 = vector.extract_strided_slice %143 {offsets = [7, 0], sizes = [1, 512], strides = [1, 1]} : vector<8x512xf32> to vector<1x512xf32>
    %189 = vector.broadcast %187 : vector<8x1xf32> to vector<8x512xf32>
    %190 = vector.broadcast %188 : vector<1x512xf32> to vector<8x512xf32>
    %191 = arith.mulf %189, %190 : vector<8x512xf32>
    %192 = arith.addf %186, %191 : vector<8x512xf32>
    %193 = math.tanh %192 : vector<8x512xf32>
    %194 = vector.extract_strided_slice %43 {offsets = [3, 0, 0], sizes = [1, 8, 8], strides = [1, 1, 1]} : vector<4x8x8xf32> to vector<1x8x8xf32>
    %195 = vector.shape_cast %194 : vector<1x8x8xf32> to vector<8x8xf32>
    %196 = vector.extract_strided_slice %195 {offsets = [0, 0], sizes = [8, 1], strides = [1, 1]} : vector<8x8xf32> to vector<8x1xf32>
    %197 = vector.extract_strided_slice %193 {offsets = [0, 0], sizes = [1, 512], strides = [1, 1]} : vector<8x512xf32> to vector<1x512xf32>
    %198 = vector.broadcast %196 : vector<8x1xf32> to vector<8x512xf32>
    %199 = vector.broadcast %197 : vector<1x512xf32> to vector<8x512xf32>
    %200 = arith.mulf %198, %199 : vector<8x512xf32>
    %201 = vector.extract_strided_slice %195 {offsets = [0, 1], sizes = [8, 1], strides = [1, 1]} : vector<8x8xf32> to vector<8x1xf32>
    %202 = vector.extract_strided_slice %193 {offsets = [1, 0], sizes = [1, 512], strides = [1, 1]} : vector<8x512xf32> to vector<1x512xf32>
    %203 = vector.broadcast %201 : vector<8x1xf32> to vector<8x512xf32>
    %204 = vector.broadcast %202 : vector<1x512xf32> to vector<8x512xf32>
    %205 = arith.mulf %203, %204 : vector<8x512xf32>
    %206 = arith.addf %200, %205 : vector<8x512xf32>
    %207 = vector.extract_strided_slice %195 {offsets = [0, 2], sizes = [8, 1], strides = [1, 1]} : vector<8x8xf32> to vector<8x1xf32>
    %208 = vector.extract_strided_slice %193 {offsets = [2, 0], sizes = [1, 512], strides = [1, 1]} : vector<8x512xf32> to vector<1x512xf32>
    %209 = vector.broadcast %207 : vector<8x1xf32> to vector<8x512xf32>
    %210 = vector.broadcast %208 : vector<1x512xf32> to vector<8x512xf32>
    %211 = arith.mulf %209, %210 : vector<8x512xf32>
    %212 = arith.addf %206, %211 : vector<8x512xf32>
    %213 = vector.extract_strided_slice %195 {offsets = [0, 3], sizes = [8, 1], strides = [1, 1]} : vector<8x8xf32> to vector<8x1xf32>
    %214 = vector.extract_strided_slice %193 {offsets = [3, 0], sizes = [1, 512], strides = [1, 1]} : vector<8x512xf32> to vector<1x512xf32>
    %215 = vector.broadcast %213 : vector<8x1xf32> to vector<8x512xf32>
    %216 = vector.broadcast %214 : vector<1x512xf32> to vector<8x512xf32>
    %217 = arith.mulf %215, %216 : vector<8x512xf32>
    %218 = arith.addf %212, %217 : vector<8x512xf32>
    %219 = vector.extract_strided_slice %195 {offsets = [0, 4], sizes = [8, 1], strides = [1, 1]} : vector<8x8xf32> to vector<8x1xf32>
    %220 = vector.extract_strided_slice %193 {offsets = [4, 0], sizes = [1, 512], strides = [1, 1]} : vector<8x512xf32> to vector<1x512xf32>
    %221 = vector.broadcast %219 : vector<8x1xf32> to vector<8x512xf32>
    %222 = vector.broadcast %220 : vector<1x512xf32> to vector<8x512xf32>
    %223 = arith.mulf %221, %222 : vector<8x512xf32>
    %224 = arith.addf %218, %223 : vector<8x512xf32>
    %225 = vector.extract_strided_slice %195 {offsets = [0, 5], sizes = [8, 1], strides = [1, 1]} : vector<8x8xf32> to vector<8x1xf32>
    %226 = vector.extract_strided_slice %193 {offsets = [5, 0], sizes = [1, 512], strides = [1, 1]} : vector<8x512xf32> to vector<1x512xf32>
    %227 = vector.broadcast %225 : vector<8x1xf32> to vector<8x512xf32>
    %228 = vector.broadcast %226 : vector<1x512xf32> to vector<8x512xf32>
    %229 = arith.mulf %227, %228 : vector<8x512xf32>
    %230 = arith.addf %224, %229 : vector<8x512xf32>
    %231 = vector.extract_strided_slice %195 {offsets = [0, 6], sizes = [8, 1], strides = [1, 1]} : vector<8x8xf32> to vector<8x1xf32>
    %232 = vector.extract_strided_slice %193 {offsets = [6, 0], sizes = [1, 512], strides = [1, 1]} : vector<8x512xf32> to vector<1x512xf32>
    %233 = vector.broadcast %231 : vector<8x1xf32> to vector<8x512xf32>
    %234 = vector.broadcast %232 : vector<1x512xf32> to vector<8x512xf32>
    %235 = arith.mulf %233, %234 : vector<8x512xf32>
    %236 = arith.addf %230, %235 : vector<8x512xf32>
    %237 = vector.extract_strided_slice %195 {offsets = [0, 7], sizes = [8, 1], strides = [1, 1]} : vector<8x8xf32> to vector<8x1xf32>
    %238 = vector.extract_strided_slice %193 {offsets = [7, 0], sizes = [1, 512], strides = [1, 1]} : vector<8x512xf32> to vector<1x512xf32>
    %239 = vector.broadcast %237 : vector<8x1xf32> to vector<8x512xf32>
    %240 = vector.broadcast %238 : vector<1x512xf32> to vector<8x512xf32>
    %241 = arith.mulf %239, %240 : vector<8x512xf32>
    %242 = arith.addf %236, %241 : vector<8x512xf32>
    %243 = math.tanh %242 : vector<8x512xf32>
    %c0_12 = arith.constant 0 : index
    %c0_13 = arith.constant 0 : index
    %244 = vector.load %arg7[%c0_12, %c0_13] : memref<3x8xf32, #tpu.memory_space<vmem>>, vector<3x8xf32>
    %245 = vector.extract_strided_slice %244 {offsets = [0, 0], sizes = [3, 1], strides = [1, 1]} : vector<3x8xf32> to vector<3x1xf32>
    %246 = vector.extract_strided_slice %243 {offsets = [0, 0], sizes = [1, 512], strides = [1, 1]} : vector<8x512xf32> to vector<1x512xf32>
    %247 = vector.broadcast %245 : vector<3x1xf32> to vector<3x512xf32>
    %248 = vector.broadcast %246 : vector<1x512xf32> to vector<3x512xf32>
    %249 = arith.mulf %247, %248 : vector<3x512xf32>
    %250 = vector.extract_strided_slice %244 {offsets = [0, 1], sizes = [3, 1], strides = [1, 1]} : vector<3x8xf32> to vector<3x1xf32>
    %251 = vector.extract_strided_slice %243 {offsets = [1, 0], sizes = [1, 512], strides = [1, 1]} : vector<8x512xf32> to vector<1x512xf32>
    %252 = vector.broadcast %250 : vector<3x1xf32> to vector<3x512xf32>
    %253 = vector.broadcast %251 : vector<1x512xf32> to vector<3x512xf32>
    %254 = arith.mulf %252, %253 : vector<3x512xf32>
    %255 = arith.addf %249, %254 : vector<3x512xf32>
    %256 = vector.extract_strided_slice %244 {offsets = [0, 2], sizes = [3, 1], strides = [1, 1]} : vector<3x8xf32> to vector<3x1xf32>
    %257 = vector.extract_strided_slice %243 {offsets = [2, 0], sizes = [1, 512], strides = [1, 1]} : vector<8x512xf32> to vector<1x512xf32>
    %258 = vector.broadcast %256 : vector<3x1xf32> to vector<3x512xf32>
    %259 = vector.broadcast %257 : vector<1x512xf32> to vector<3x512xf32>
    %260 = arith.mulf %258, %259 : vector<3x512xf32>
    %261 = arith.addf %255, %260 : vector<3x512xf32>
    %262 = vector.extract_strided_slice %244 {offsets = [0, 3], sizes = [3, 1], strides = [1, 1]} : vector<3x8xf32> to vector<3x1xf32>
    %263 = vector.extract_strided_slice %243 {offsets = [3, 0], sizes = [1, 512], strides = [1, 1]} : vector<8x512xf32> to vector<1x512xf32>
    %264 = vector.broadcast %262 : vector<3x1xf32> to vector<3x512xf32>
    %265 = vector.broadcast %263 : vector<1x512xf32> to vector<3x512xf32>
    %266 = arith.mulf %264, %265 : vector<3x512xf32>
    %267 = arith.addf %261, %266 : vector<3x512xf32>
    %268 = vector.extract_strided_slice %244 {offsets = [0, 4], sizes = [3, 1], strides = [1, 1]} : vector<3x8xf32> to vector<3x1xf32>
    %269 = vector.extract_strided_slice %243 {offsets = [4, 0], sizes = [1, 512], strides = [1, 1]} : vector<8x512xf32> to vector<1x512xf32>
    %270 = vector.broadcast %268 : vector<3x1xf32> to vector<3x512xf32>
    %271 = vector.broadcast %269 : vector<1x512xf32> to vector<3x512xf32>
    %272 = arith.mulf %270, %271 : vector<3x512xf32>
    %273 = arith.addf %267, %272 : vector<3x512xf32>
    %274 = vector.extract_strided_slice %244 {offsets = [0, 5], sizes = [3, 1], strides = [1, 1]} : vector<3x8xf32> to vector<3x1xf32>
    %275 = vector.extract_strided_slice %243 {offsets = [5, 0], sizes = [1, 512], strides = [1, 1]} : vector<8x512xf32> to vector<1x512xf32>
    %276 = vector.broadcast %274 : vector<3x1xf32> to vector<3x512xf32>
    %277 = vector.broadcast %275 : vector<1x512xf32> to vector<3x512xf32>
    %278 = arith.mulf %276, %277 : vector<3x512xf32>
    %279 = arith.addf %273, %278 : vector<3x512xf32>
    %280 = vector.extract_strided_slice %244 {offsets = [0, 6], sizes = [3, 1], strides = [1, 1]} : vector<3x8xf32> to vector<3x1xf32>
    %281 = vector.extract_strided_slice %243 {offsets = [6, 0], sizes = [1, 512], strides = [1, 1]} : vector<8x512xf32> to vector<1x512xf32>
    %282 = vector.broadcast %280 : vector<3x1xf32> to vector<3x512xf32>
    %283 = vector.broadcast %281 : vector<1x512xf32> to vector<3x512xf32>
    %284 = arith.mulf %282, %283 : vector<3x512xf32>
    %285 = arith.addf %279, %284 : vector<3x512xf32>
    %286 = vector.extract_strided_slice %244 {offsets = [0, 7], sizes = [3, 1], strides = [1, 1]} : vector<3x8xf32> to vector<3x1xf32>
    %287 = vector.extract_strided_slice %243 {offsets = [7, 0], sizes = [1, 512], strides = [1, 1]} : vector<8x512xf32> to vector<1x512xf32>
    %288 = vector.broadcast %286 : vector<3x1xf32> to vector<3x512xf32>
    %289 = vector.broadcast %287 : vector<1x512xf32> to vector<3x512xf32>
    %290 = arith.mulf %288, %289 : vector<3x512xf32>
    %291 = arith.addf %285, %290 : vector<3x512xf32>
    %cst = arith.constant 5.000000e-01 : f32
    %292 = vector.broadcast %cst : f32 to vector<3x512xf32>
    %293 = arith.mulf %292, %291 : vector<3x512xf32>
    %294 = math.tanh %293 : vector<3x512xf32>
    %cst_14 = arith.constant 5.000000e-01 : f32
    %295 = vector.broadcast %cst_14 : f32 to vector<3x512xf32>
    %296 = arith.mulf %295, %294 : vector<3x512xf32>
    %cst_15 = arith.constant 5.000000e-01 : f32
    %297 = vector.broadcast %cst_15 : f32 to vector<3x512xf32>
    %298 = arith.addf %296, %297 : vector<3x512xf32>
    %c0_16 = arith.constant 0 : index
    %c0_17 = arith.constant 0 : index
    %299 = vector.load %arg8[%c0_16, %c0_17] : memref<3x512xf32, #tpu.memory_space<vmem>>, vector<3x512xf32>
    tpu.vector_store %arg8[%c0_16, %c0_17], %298 {strides = array<i32>} : memref<3x512xf32, #tpu.memory_space<vmem>>, vector<3x512xf32>,
    return
  }
  func.func @transform_0(%arg0: i32) -> (i32, i32) {
    %c0_i32 = arith.constant 0 : i32
    %c0_i32_0 = arith.constant 0 : i32
    return %c0_i32, %arg0 : i32, i32
  }
  func.func @transform_1(%arg0: i32) -> (i32, i32) {
    %c0_i32 = arith.constant 0 : i32
    %c0_i32_0 = arith.constant 0 : i32
    return %c0_i32, %arg0 : i32, i32
  }
  func.func @transform_2(%arg0: i32) -> (i32, i32) {
    %c0_i32 = arith.constant 0 : i32
    %c0_i32_0 = arith.constant 0 : i32
    %c0_i32_1 = arith.constant 0 : i32
    return %c0_i32, %c0_i32_0 : i32, i32
  }
  func.func @transform_3(%arg0: i32) -> (i32, i32) {
    %c0_i32 = arith.constant 0 : i32
    %c0_i32_0 = arith.constant 0 : i32
    %c0_i32_1 = arith.constant 0 : i32
    return %c0_i32, %c0_i32_0 : i32, i32
  }
  func.func @transform_4(%arg0: i32) -> (i32, i32) {
    %c0_i32 = arith.constant 0 : i32
    %c0_i32_0 = arith.constant 0 : i32
    %c0_i32_1 = arith.constant 0 : i32
    return %c0_i32, %c0_i32_0 : i32, i32
  }
  func.func @transform_5(%arg0: i32) -> (i32, i32, i32) {
    %c0_i32 = arith.constant 0 : i32
    %c0_i32_0 = arith.constant 0 : i32
    %c0_i32_1 = arith.constant 0 : i32
    %c0_i32_2 = arith.constant 0 : i32
    return %c0_i32, %c0_i32_0, %c0_i32_1 : i32, i32, i32
  }
  func.func @transform_6(%arg0: i32) -> (i32, i32) {
    %c0_i32 = arith.constant 0 : i32
    %c0_i32_0 = arith.constant 0 : i32
    %c0_i32_1 = arith.constant 0 : i32
    return %c0_i32, %c0_i32_0 : i32, i32
  }
  func.func @transform_7(%arg0: i32) -> (i32, i32) {
    %c0_i32 = arith.constant 0 : i32
    %c0_i32_0 = arith.constant 0 : i32
    return %c0_i32, %arg0 : i32, i32
  }
}

</mosaic_0001>

<llo_original>
// kernel: tpu_custom_call.1
$region0: #{tpu_custom_call.1}
  #allocation0 [shape = 'u32[]', space=smem, size = 0x4, offset = 0x4, fixed_abs, tag = 'smem constant byte address 0x4 - core index']
  #allocation1 [shape = 'u32[144,128]{1,0:T(1,128)}', space=vmem, size = 0x12000, scoped, tag = 'internal scratch']
  %s0 = inlined_call_operand.hbm [shape: f32[3,1000], index: 0, kind: input, shape index: {}]
  %s1 = inlined_call_operand.hbm [shape: f32[3,1000], index: 1, kind: input, shape index: {}]
  %s2 = inlined_call_operand.vmem [shape: f32[8,3], index: 2, kind: input, shape index: {}]
  %s3 = inlined_call_operand.vmem [shape: f32[8,3], index: 3, kind: input, shape index: {}]
  %s4 = inlined_call_operand.vmem [shape: f32[8,1], index: 4, kind: input, shape index: {}]
  %s5 = inlined_call_operand.hbm [shape: f32[4,8,8], index: 5, kind: input, shape index: {}]
  %s6 = inlined_call_operand.vmem [shape: f32[3,8], index: 6, kind: input, shape index: {}]
  %s7 = inlined_call_operand.hbm [shape: f32[3,1000], index: 7, kind: output, shape index: {}]
  %s8 = sld [smem:[#allocation0]]
  $region73: #{tpu_custom_call.1} parent=0
    _
  %s10 = ssub.s32 1, %s8
  %s11 = scalar_select 0, %s10, %s8
  $region1: #{tpu_custom_call.1} parent=0
    #allocation2 [shape = 'u8[16384]{0}', space=vmem, size = 0x4000, scoped, tag = 'input window, operand 0']
    #allocation3 [shape = 's32[2]{0}', space=sflag, size = 0x8, scoped, tag = 'scoped memory for tpu_custom_call.1']
    #allocation4 [shape = 's32[2]{0}', space=sflag, size = 0x8, scoped, tag = 'scoped memory for tpu_custom_call.1']
    #allocation5 [shape = 'u8[16384]{0}', space=vmem, size = 0x4000, scoped, tag = 'input window, operand 1']
    #allocation6 [shape = 's32[2]{0}', space=sflag, size = 0x8, scoped, tag = 'scoped memory for tpu_custom_call.1']
    #allocation7 [shape = 'u8[16384]{0}', space=vmem, size = 0x4000, scoped, tag = 'input window, operand 5, single buffered']
    #allocation8 [shape = 'u8[16384]{0}', space=vmem, size = 0x4000, scoped, tag = 'output window, operand 0']
    %12 = vsyncpa [#allocation3], 0
    %s13 = scalar_lea.sflag [#allocation3], 1
    %14 = vsyncpa %s13, 0
    %15 = vsyncpa [#allocation6], 0
    %s16 = scalar_lea.sflag [#allocation6], 1
    %17 = vsyncpa %s16, 0
    %18 = vsyncpa [#allocation4], 0
    %s19 = scalar_lea.sflag [#allocation4], 1
    %20 = vsyncpa %s19, 0
    loop: start=0, step=1, limit=4
    $region2: #{tpu_custom_call.1} parent=1 // loop_pre_header
      _
    $region3: #{tpu_custom_call.1} parent=1 // loop_header
      %s22 = sphi 0, %s26
      %p23 = scmp.ge.s32.totalorder %s22, 4
      %s32 = sphi 0, %s34
      %s35 = sphi 0, %s32
      %s36 = sphi 0, %s35
      %s52 = sphi 0, %s36
      %s58 = sphi 0, %s60
      %s61 = sphi 0, %s58
      %s62 = sphi 0, %s61
      %s78 = sphi 0, %s62
      %s82 = sphi 0, %s82
      %s84 = sphi 0, %s82
      %s85 = sphi 0, %s84
      %s99 = sphi 0, %s85
      %s103 = sphi 0, %s103
      %s105 = sphi 0, %s103
      %s106 = sphi 0, %s105
      %s120 = sphi 0, %s106
      %s124 = sphi 0, %s124
      %s126 = sphi 0, %s124
      %s127 = sphi 0, %s126
      %s141 = sphi 0, %s127
      %s145 = sphi 0, %s145
      %s147 = sphi 0, %s145
      %s148 = sphi 0, %s147
      %s162 = sphi 0, %s148
      %s166 = sphi 0, %s166
      %s168 = sphi 0, %s166
      %s169 = sphi 0, %s168
      %s183 = sphi 0, %s169
      %s189 = sphi 0, %s191
      %s192 = sphi 0, %s189
      %s193 = sphi 0, %s192
      %s209 = sphi 0, %s193
    $region4: #{tpu_custom_call.1} parent=1 // loop_header_branch
      %25 = sbr.rel (%p23) target = $region8
    $region5: #{tpu_custom_call.1} parent=1 // loop_body
      %s27 = ssub.s32 %s22, 1
      %s28 = ssub.s32 %s22, 2
      %s29 = sadd.s32 %s22, 1
      %s30 = ssub.s32 %s22, %s29
      %p31 = scmp.eq.s32.totalorder %s30, 0
      %s33 = sadd.s32 %s32, 1
      %s34 = scalar_select %p31, %s32, %s33
      %p37 = pneg %p31
      %p38 = scmp.eq.s32.totalorder %s22, 1
      %p39 = por %p37, %p38
      %p40 = scmp.ne.s32.totalorder %s32, %s35
      %p41 = scmp.eq.s32.totalorder %s22, 0
      %p42 = por %p40, %p41
      %p43 = scmp.ne.s32.totalorder %s32, %s35
      %p44 = scmp.eq.s32.totalorder %s27, 1
      %p45 = por %p43, %p44
      %p46 = scmp.ne.s32.totalorder %s35, %s36
      %p47 = scmp.eq.s32.totalorder %s27, 0
      %p48 = por %p46, %p47
      %p49 = scmp.ne.s32.totalorder %s35, %s36
      %p50 = scmp.eq.s32.totalorder %s28, 1
      %p51 = por %p49, %p50
      %p53 = scmp.ne.s32.totalorder %s36, %s52
      %p54 = scmp.eq.s32.totalorder %s28, 0
      %p55 = por %p53, %p54
      %s56 = ssub.s32 %s22, %s29
      %p57 = scmp.eq.s32.totalorder %s56, 0
      %s59 = sadd.s32 %s58, 1
      %s60 = scalar_select %p57, %s58, %s59
      %p63 = pneg %p57
      %p64 = scmp.eq.s32.totalorder %s22, 1
      %p65 = por %p63, %p64
      %p66 = scmp.ne.s32.totalorder %s58, %s61
      %p67 = scmp.eq.s32.totalorder %s22, 0
      %p68 = por %p66, %p67
      %p69 = scmp.ne.s32.totalorder %s58, %s61
      %p70 = scmp.eq.s32.totalorder %s27, 1
      %p71 = por %p69, %p70
      %p72 = scmp.ne.s32.totalorder %s61, %s62
      %p73 = scmp.eq.s32.totalorder %s27, 0
      %p74 = por %p72, %p73
      %p75 = scmp.ne.s32.totalorder %s61, %s62
      %p76 = scmp.eq.s32.totalorder %s28, 1
      %p77 = por %p75, %p76
      %p79 = scmp.ne.s32.totalorder %s62, %s78
      %p80 = scmp.eq.s32.totalorder %s28, 0
      %p81 = por %p79, %p80
      %s83 = sadd.s32 %s82, 1
      %p86 = scmp.eq.s32.totalorder %s22, 1
      %p87 = scmp.ne.s32.totalorder %s82, %s84
      %p88 = scmp.eq.s32.totalorder %s22, 0
      %p89 = por %p87, %p88
      %p90 = scmp.ne.s32.totalorder %s82, %s84
      %p91 = scmp.eq.s32.totalorder %s27, 1
      %p92 = por %p90, %p91
      %p93 = scmp.ne.s32.totalorder %s84, %s85
      %p94 = scmp.eq.s32.totalorder %s27, 0
      %p95 = por %p93, %p94
      %p96 = scmp.ne.s32.totalorder %s84, %s85
      %p97 = scmp.eq.s32.totalorder %s28, 1
      %p98 = por %p96, %p97
      %p100 = scmp.ne.s32.totalorder %s85, %s99
      %p101 = scmp.eq.s32.totalorder %s28, 0
      %p102 = por %p100, %p101
      %s104 = sadd.s32 %s103, 1
      %p107 = scmp.eq.s32.totalorder %s22, 1
      %p108 = scmp.ne.s32.totalorder %s103, %s105
      %p109 = scmp.eq.s32.totalorder %s22, 0
      %p110 = por %p108, %p109
      %p111 = scmp.ne.s32.totalorder %s103, %s105
      %p112 = scmp.eq.s32.totalorder %s27, 1
      %p113 = por %p111, %p112
      %p114 = scmp.ne.s32.totalorder %s105, %s106
      %p115 = scmp.eq.s32.totalorder %s27, 0
      %p116 = por %p114, %p115
      %p117 = scmp.ne.s32.totalorder %s105, %s106
      %p118 = scmp.eq.s32.totalorder %s28, 1
      %p119 = por %p117, %p118
      %p121 = scmp.ne.s32.totalorder %s106, %s120
      %p122 = scmp.eq.s32.totalorder %s28, 0
      %p123 = por %p121, %p122
      %s125 = sadd.s32 %s124, 1
      %p128 = scmp.eq.s32.totalorder %s22, 1
      %p129 = scmp.ne.s32.totalorder %s124, %s126
      %p130 = scmp.eq.s32.totalorder %s22, 0
      %p131 = por %p129, %p130
      %p132 = scmp.ne.s32.totalorder %s124, %s126
      %p133 = scmp.eq.s32.totalorder %s27, 1
      %p134 = por %p132, %p133
      %p135 = scmp.ne.s32.totalorder %s126, %s127
      %p136 = scmp.eq.s32.totalorder %s27, 0
      %p137 = por %p135, %p136
      %p138 = scmp.ne.s32.totalorder %s126, %s127
      %p139 = scmp.eq.s32.totalorder %s28, 1
      %p140 = por %p138, %p139
      %p142 = scmp.ne.s32.totalorder %s127, %s141
      %p143 = scmp.eq.s32.totalorder %s28, 0
      %p144 = por %p142, %p143
      %s146 = sadd.s32 %s145, 1
      %p149 = scmp.eq.s32.totalorder %s22, 1
      %p150 = scmp.ne.s32.totalorder %s145, %s147
      %p151 = scmp.eq.s32.totalorder %s22, 0
      %p152 = por %p150, %p151
      %p153 = scmp.ne.s32.totalorder %s145, %s147
      %p154 = scmp.eq.s32.totalorder %s27, 1
      %p155 = por %p153, %p154
      %p156 = scmp.ne.s32.totalorder %s147, %s148
      %p157 = scmp.eq.s32.totalorder %s27, 0
      %p158 = por %p156, %p157
      %p159 = scmp.ne.s32.totalorder %s147, %s148
      %p160 = scmp.eq.s32.totalorder %s28, 1
      %p161 = por %p159, %p160
      %p163 = scmp.ne.s32.totalorder %s148, %s162
      %p164 = scmp.eq.s32.totalorder %s28, 0
      %p165 = por %p163, %p164
      %s167 = sadd.s32 %s166, 1
      %p170 = scmp.eq.s32.totalorder %s22, 1
      %p171 = scmp.ne.s32.totalorder %s166, %s168
      %p172 = scmp.eq.s32.totalorder %s22, 0
      %p173 = por %p171, %p172
      %p174 = scmp.ne.s32.totalorder %s166, %s168
      %p175 = scmp.eq.s32.totalorder %s27, 1
      %p176 = por %p174, %p175
      %p177 = scmp.ne.s32.totalorder %s168, %s169
      %p178 = scmp.eq.s32.totalorder %s27, 0
      %p179 = por %p177, %p178
      %p180 = scmp.ne.s32.totalorder %s168, %s169
      %p181 = scmp.eq.s32.totalorder %s28, 1
      %p182 = por %p180, %p181
      %p184 = scmp.ne.s32.totalorder %s169, %s183
      %p185 = scmp.eq.s32.totalorder %s28, 0
      %p186 = por %p184, %p185
      %s187 = ssub.s32 %s22, %s29
      %p188 = scmp.eq.s32.totalorder %s187, 0
      %s190 = sadd.s32 %s189, 1
      %s191 = scalar_select %p188, %s189, %s190
      %p194 = pneg %p188
      %p195 = scmp.eq.s32.totalorder %s22, 1
      %p196 = por %p194, %p195
      %p197 = scmp.ne.s32.totalorder %s189, %s192
      %p198 = scmp.eq.s32.totalorder %s22, 0
      %p199 = por %p197, %p198
      %p200 = scmp.ne.s32.totalorder %s189, %s192
      %p201 = scmp.eq.s32.totalorder %s27, 1
      %p202 = por %p200, %p201
      %p203 = scmp.ne.s32.totalorder %s192, %s193
      %p204 = scmp.eq.s32.totalorder %s27, 0
      %p205 = por %p203, %p204
      %p206 = scmp.ne.s32.totalorder %s192, %s193
      %p207 = scmp.eq.s32.totalorder %s28, 1
      %p208 = por %p206, %p207
      %p210 = scmp.ne.s32.totalorder %s193, %s209
      %p211 = scmp.eq.s32.totalorder %s28, 0
      %p212 = por %p210, %p211
      %p213 = scmp.le.s32.totalorder 1, %s22
      %p214 = scmp.lt.s32.totalorder %s22, 3
      %p215 = pnand %p213, %p214
      %p216 = pneg %p215
      // Predicated region
      $region9: #{tpu_custom_call.1} parent=5 // pred_check
        _
      $region10: #{tpu_custom_call.1} parent=5 // pred_check_branch
        %218 = sbr.rel (%p215) target = $region12
      $region11: #{tpu_custom_call.1} parent=5 // pred_region
        %s219 = ssub.s32 %s22, 1
        // Predicated region
        $region13: #{tpu_custom_call.1} parent=11 // pred_check
          %p220 = pneg %p95
        $region14: #{tpu_custom_call.1} parent=11 // pred_check_branch
          %222 = sbr.rel (%p220) target = $region16
        $region15: #{tpu_custom_call.1} parent=11 // pred_region
          _
        $region16: #{tpu_custom_call.1} parent=11 // pred_fallthru
          _
        // Predicated region
        $region17: #{tpu_custom_call.1} parent=11 // pred_check
          %p223 = pneg %p116
        $region18: #{tpu_custom_call.1} parent=11 // pred_check_branch
          %225 = sbr.rel (%p223) target = $region20
        $region19: #{tpu_custom_call.1} parent=11 // pred_region
          _
        $region20: #{tpu_custom_call.1} parent=11 // pred_fallthru
          _
        // Predicated region
        $region21: #{tpu_custom_call.1} parent=11 // pred_check
          %p226 = pneg %p137
        $region22: #{tpu_custom_call.1} parent=11 // pred_check_branch
          %228 = sbr.rel (%p226) target = $region24
        $region23: #{tpu_custom_call.1} parent=11 // pred_region
          _
        $region24: #{tpu_custom_call.1} parent=11 // pred_fallthru
          _
        // Predicated region
        $region25: #{tpu_custom_call.1} parent=11 // pred_check
          %p229 = pneg %p158
        $region26: #{tpu_custom_call.1} parent=11 // pred_check_branch
          %231 = sbr.rel (%p229) target = $region28
        $region27: #{tpu_custom_call.1} parent=11 // pred_region
          %s233 = ssub.s32 512, 512
          %234 = vsyncadd [#allocation6], %s233
          %s235 = sshll.u32 [#allocation7], 4
          %s236 = int_to_ptr.vmem [resolvable:$true] %s235
          %241 = dma.hbm_to_vmem [thread:$0]  %s5, 512, %s236, [#allocation6], 128, 128, 8
        $region28: #{tpu_custom_call.1} parent=11 // pred_fallthru
          _
        // Predicated region
        $region29: #{tpu_custom_call.1} parent=11 // pred_check
          %p242 = pneg %p179
        $region30: #{tpu_custom_call.1} parent=11 // pred_check_branch
          %244 = sbr.rel (%p242) target = $region32
        $region31: #{tpu_custom_call.1} parent=11 // pred_region
          _
        $region32: #{tpu_custom_call.1} parent=11 // pred_fallthru
          _
      $region12: #{tpu_custom_call.1} parent=5 // pred_fallthru
        _
      %p245 = scmp.lt.s32.totalorder %s22, 2
      // Predicated region
      $region33: #{tpu_custom_call.1} parent=5 // pred_check
        %p246 = pneg %p245
      $region34: #{tpu_custom_call.1} parent=5 // pred_check_branch
        %248 = sbr.rel (%p246) target = $region36
      $region35: #{tpu_custom_call.1} parent=5 // pred_region
        // Predicated region
        $region37: #{tpu_custom_call.1} parent=35 // pred_check
          %p249 = pneg %p42
        $region38: #{tpu_custom_call.1} parent=35 // pred_check_branch
          %251 = sbr.rel (%p249) target = $region40
        $region39: #{tpu_custom_call.1} parent=35 // pred_region
          %s252 = sand.u32 %s32, 1
          %s253 = scalar_lea.sflag [#allocation3], %s252
          %s254 = sand.u32 %s32, 1
          %s255 = smul.addr %s254, 16
          %s256 = scalar_lea.vmem [#allocation2], %s255
          %s257 = smul.u32 4, %s22
          %s259 = ssub.s32 256, 256
          %260 = vsyncadd %s253, %s259
          %s261 = smul.addr %s257, 64
          %s262 = scalar_lea.hbm %s0, %s261
          %s264 = sshll.u32 %s256, 4
          %s265 = int_to_ptr.vmem [resolvable:$true] %s264
          %267 = dma.hbm_to_vmem [thread:$0]  %s262, 256, %s265, %s253
        $region40: #{tpu_custom_call.1} parent=35 // pred_fallthru
          _
        // Predicated region
        $region41: #{tpu_custom_call.1} parent=35 // pred_check
          %p268 = pneg %p68
        $region42: #{tpu_custom_call.1} parent=35 // pred_check_branch
          %270 = sbr.rel (%p268) target = $region44
        $region43: #{tpu_custom_call.1} parent=35 // pred_region
          %s271 = sand.u32 %s22, 1
          %s272 = scalar_lea.sflag [#allocation6], %s271
          %s273 = sand.u32 %s58, 1
          %s274 = smul.addr %s273, 16
          %s275 = scalar_lea.vmem [#allocation5], %s274
          %s276 = smul.u32 4, %s22
          %s278 = ssub.s32 256, 256
          %279 = vsyncadd %s272, %s278
          %s280 = smul.addr %s276, 64
          %s281 = scalar_lea.hbm %s1, %s280
          %s283 = sshll.u32 %s275, 4
          %s284 = int_to_ptr.vmem [resolvable:$true] %s283
          %286 = dma.hbm_to_vmem [thread:$0]  %s281, 256, %s284, %s272
        $region44: #{tpu_custom_call.1} parent=35 // pred_fallthru
          _
      $region36: #{tpu_custom_call.1} parent=5 // pred_fallthru
        _
      %p287 = scmp.le.s32.totalorder 1, %s22
      %p288 = scmp.lt.s32.totalorder %s22, 3
      %p289 = pnand %p287, %p288
      %p290 = pneg %p289
      // Predicated region
      $region45: #{tpu_custom_call.1} parent=5 // pred_check
        _
      $region46: #{tpu_custom_call.1} parent=5 // pred_check_branch
        %292 = sbr.rel (%p289) target = $region48
      $region47: #{tpu_custom_call.1} parent=5 // pred_region
        %s293 = ssub.s32 %s22, 1
        %s294 = sand.u32 %s35, 1
        %s295 = scalar_lea.sflag [#allocation3], %s294
        %s296 = sand.u32 %s35, 1
        %s297 = smul.addr %s296, 16
        %s298 = scalar_lea.vmem [#allocation2], %s297
        // Predicated region
        $region49: #{tpu_custom_call.1} parent=47 // pred_check
          %p299 = pneg %p48
        $region50: #{tpu_custom_call.1} parent=47 // pred_check_branch
          %301 = sbr.rel (%p299) target = $region52
        $region51: #{tpu_custom_call.1} parent=47 // pred_region
          %302 = dma.done %s295, 256
        $region52: #{tpu_custom_call.1} parent=47 // pred_fallthru
          _
        %s303 = sand.u32 %s27, 1
        %s304 = scalar_lea.sflag [#allocation6], %s303
        %s305 = sand.u32 %s61, 1
        %s306 = smul.addr %s305, 16
        %s307 = scalar_lea.vmem [#allocation5], %s306
        // Predicated region
        $region53: #{tpu_custom_call.1} parent=47 // pred_check
          %p308 = pneg %p74
        $region54: #{tpu_custom_call.1} parent=47 // pred_check_branch
          %310 = sbr.rel (%p308) target = $region56
        $region55: #{tpu_custom_call.1} parent=47 // pred_region
          %311 = dma.done %s304, 256
        $region56: #{tpu_custom_call.1} parent=47 // pred_fallthru
          _
        // Predicated region
        $region57: #{tpu_custom_call.1} parent=47 // pred_check
          %p312 = pneg %p158
        $region58: #{tpu_custom_call.1} parent=47 // pred_check_branch
          %314 = sbr.rel (%p312) target = $region60
        $region59: #{tpu_custom_call.1} parent=47 // pred_region
          %315 = dma.done [#allocation6], 512
        $region60: #{tpu_custom_call.1} parent=47 // pred_fallthru
          _
        %s316 = sand.u32 %s35, 1
        %s317 = scalar_lea.sflag [#allocation3], %s316
        %s318 = sand.u32 %s35, 1
        %s319 = smul.addr %s318, 16
        %s320 = scalar_lea.vmem [#allocation2], %s319
        %p321 = pneg %p48
        %p322 = pneg %p45
        %s323 = sand.u32 %s27, 1
        %s324 = scalar_lea.sflag [#allocation6], %s323
        %s325 = sand.u32 %s61, 1
        %s326 = smul.addr %s325, 16
        %s327 = scalar_lea.vmem [#allocation5], %s326
        %p328 = pneg %p74
        %p329 = pneg %p71
        %p330 = pneg %p95
        %p331 = pneg %p92
        %p332 = pneg %p116
        %p333 = pneg %p113
        %p334 = pneg %p137
        %p335 = pneg %p134
        %p336 = pneg %p158
        %p337 = pneg %p155
        %p338 = pneg %p179
        %p339 = pneg %p176
        %p340 = pneg %p205
        %p341 = pneg %p202
        %s342 = sand.u32 %s192, 1
        %s343 = scalar_lea.sflag [#allocation4], %s342
        %s344 = sand.u32 %s192, 1
        %s345 = smul.addr %s344, 16
        %s346 = scalar_lea.vmem [#allocation8], %s345
        %s347 = smul.u32 4, %s27
        %s348 = smul.u32 4, %s27
        %s349 = smul.u32 4, %s27
        %v350 = vld [vmem:[%s2] sm:$0xff]
        %v351 = vld [vmem:[%s298] sm:$0x77]
        %v352 = vld [vmem:[%s298 + $0x8] sm:$0x77]
        %354 = vset.pattern.permute.xlu0 0
        %355 = vperm.xlu0 %354, %v350
        %v356 = vpop.permute.xlu0 %355
        %v360 = vlaneseq
        %v361 = vshrl.u32 %v360, 7
        %v362 = vsub.s32 0, %v361
        %v363 = vrot.slane %v351, %v362
        %v364 = vlaneseq
        %v365 = vshrl.u32 %v364, 7
        %v366 = vsub.s32 4, %v365
        %v367 = vrot.slane %v351, %v366
        %v368 = vlaneseq
        %v369 = vshrl.u32 %v368, 7
        %v370 = vsub.s32 0, %v369
        %v371 = vrot.slane %v352, %v370
        %v372 = vlaneseq
        %v373 = vshrl.u32 %v372, 7
        %v374 = vsub.s32 4, %v373
        %v375 = vrot.slane %v352, %v374
        %v380 = vlaneseq
        %v381 = vshrl.u32 %v380, 7
        %v382 = vsub.s32 0, %v381
        %v383 = vrot.slane %v363, %v382
        %v384 = vlaneseq
        %v385 = vshrl.u32 %v384, 7
        %v386 = vsub.s32 0, %v385
        %v387 = vrot.slane %v367, %v386
        %v388 = vlaneseq
        %v389 = vshrl.u32 %v388, 7
        %v390 = vsub.s32 0, %v389
        %v391 = vrot.slane %v371, %v390
        %v392 = vlaneseq
        %v393 = vshrl.u32 %v392, 7
        %v394 = vsub.s32 0, %v393
        %v395 = vrot.slane %v375, %v394
        %v396 = vmul.f32 %v356, %v383
        %v397 = vmul.f32 %v356, %v387
        %v398 = vmul.f32 %v356, %v391
        %v399 = vmul.f32 %v356, %v395
        %400 = vset.pattern.permute.xlu0 1
        %401 = vperm.xlu0 %400, %v350
        %v402 = vpop.permute.xlu0 %401
        %v404 = vlaneseq
        %v405 = vshrl.u32 %v404, 7
        %v406 = vsub.s32 1, %v405
        %v407 = vrot.slane %v351, %v406
        %v408 = vlaneseq
        %v409 = vshrl.u32 %v408, 7
        %v410 = vsub.s32 5, %v409
        %v411 = vrot.slane %v351, %v410
        %v412 = vlaneseq
        %v413 = vshrl.u32 %v412, 7
        %v414 = vsub.s32 1, %v413
        %v415 = vrot.slane %v352, %v414
        %v416 = vlaneseq
        %v417 = vshrl.u32 %v416, 7
        %v418 = vsub.s32 5, %v417
        %v419 = vrot.slane %v352, %v418
        %v424 = vlaneseq
        %v425 = vshrl.u32 %v424, 7
        %v426 = vsub.s32 1, %v425
        %v427 = vrot.slane %v407, %v426
        %v428 = vlaneseq
        %v429 = vshrl.u32 %v428, 7
        %v430 = vsub.s32 1, %v429
        %v431 = vrot.slane %v411, %v430
        %v432 = vlaneseq
        %v433 = vshrl.u32 %v432, 7
        %v434 = vsub.s32 1, %v433
        %v435 = vrot.slane %v415, %v434
        %v436 = vlaneseq
        %v437 = vshrl.u32 %v436, 7
        %v438 = vsub.s32 1, %v437
        %v439 = vrot.slane %v419, %v438
        %v440 = vmul.f32 %v402, %v427
        %v441 = vmul.f32 %v402, %v431
        %v442 = vmul.f32 %v402, %v435
        %v443 = vmul.f32 %v402, %v439
        %v444 = vadd.f32 %v396, %v440
        %v445 = vadd.f32 %v397, %v441
        %v446 = vadd.f32 %v398, %v442
        %v447 = vadd.f32 %v399, %v443
        %448 = vset.pattern.permute.xlu0 2
        %449 = vperm.xlu0 %448, %v350
        %v450 = vpop.permute.xlu0 %449
        %v452 = vlaneseq
        %v453 = vshrl.u32 %v452, 7
        %v454 = vsub.s32 2, %v453
        %v455 = vrot.slane %v351, %v454
        %v456 = vlaneseq
        %v457 = vshrl.u32 %v456, 7
        %v458 = vsub.s32 6, %v457
        %v459 = vrot.slane %v351, %v458
        %v460 = vlaneseq
        %v461 = vshrl.u32 %v460, 7
        %v462 = vsub.s32 2, %v461
        %v463 = vrot.slane %v352, %v462
        %v464 = vlaneseq
        %v465 = vshrl.u32 %v464, 7
        %v466 = vsub.s32 6, %v465
        %v467 = vrot.slane %v352, %v466
        %v472 = vlaneseq
        %v473 = vshrl.u32 %v472, 7
        %v474 = vsub.s32 2, %v473
        %v475 = vrot.slane %v455, %v474
        %v476 = vlaneseq
        %v477 = vshrl.u32 %v476, 7
        %v478 = vsub.s32 2, %v477
        %v479 = vrot.slane %v459, %v478
        %v480 = vlaneseq
        %v481 = vshrl.u32 %v480, 7
        %v482 = vsub.s32 2, %v481
        %v483 = vrot.slane %v463, %v482
        %v484 = vlaneseq
        %v485 = vshrl.u32 %v484, 7
        %v486 = vsub.s32 2, %v485
        %v487 = vrot.slane %v467, %v486
        %v488 = vmul.f32 %v450, %v475
        %v489 = vmul.f32 %v450, %v479
        %v490 = vmul.f32 %v450, %v483
        %v491 = vmul.f32 %v450, %v487
        %v492 = vadd.f32 %v444, %v488
        %v493 = vadd.f32 %v445, %v489
        %v494 = vadd.f32 %v446, %v490
        %v495 = vadd.f32 %v447, %v491
        %v496 = vld [vmem:[%s3] sm:$0xff]
        %v497 = vld [vmem:[%s307] sm:$0x77]
        %v498 = vld [vmem:[%s307 + $0x8] sm:$0x77]
        %500 = vset.pattern.permute.xlu0 0
        %501 = vperm.xlu0 %500, %v496
        %v502 = vpop.permute.xlu0 %501
        %v506 = vlaneseq
        %v507 = vshrl.u32 %v506, 7
        %v508 = vsub.s32 0, %v507
        %v509 = vrot.slane %v497, %v508
        %v510 = vlaneseq
        %v511 = vshrl.u32 %v510, 7
        %v512 = vsub.s32 4, %v511
        %v513 = vrot.slane %v497, %v512
        %v514 = vlaneseq
        %v515 = vshrl.u32 %v514, 7
        %v516 = vsub.s32 0, %v515
        %v517 = vrot.slane %v498, %v516
        %v518 = vlaneseq
        %v519 = vshrl.u32 %v518, 7
        %v520 = vsub.s32 4, %v519
        %v521 = vrot.slane %v498, %v520
        %v526 = vlaneseq
        %v527 = vshrl.u32 %v526, 7
        %v528 = vsub.s32 0, %v527
        %v529 = vrot.slane %v509, %v528
        %v530 = vlaneseq
        %v531 = vshrl.u32 %v530, 7
        %v532 = vsub.s32 0, %v531
        %v533 = vrot.slane %v513, %v532
        %v534 = vlaneseq
        %v535 = vshrl.u32 %v534, 7
        %v536 = vsub.s32 0, %v535
        %v537 = vrot.slane %v517, %v536
        %v538 = vlaneseq
        %v539 = vshrl.u32 %v538, 7
        %v540 = vsub.s32 0, %v539
        %v541 = vrot.slane %v521, %v540
        %v542 = vmul.f32 %v502, %v529
        %v543 = vmul.f32 %v502, %v533
        %v544 = vmul.f32 %v502, %v537
        %v545 = vmul.f32 %v502, %v541
        %546 = vset.pattern.permute.xlu0 1
        %547 = vperm.xlu0 %546, %v496
        %v548 = vpop.permute.xlu0 %547
        %v550 = vlaneseq
        %v551 = vshrl.u32 %v550, 7
        %v552 = vsub.s32 1, %v551
        %v553 = vrot.slane %v497, %v552
        %v554 = vlaneseq
        %v555 = vshrl.u32 %v554, 7
        %v556 = vsub.s32 5, %v555
        %v557 = vrot.slane %v497, %v556
        %v558 = vlaneseq
        %v559 = vshrl.u32 %v558, 7
        %v560 = vsub.s32 1, %v559
        %v561 = vrot.slane %v498, %v560
        %v562 = vlaneseq
        %v563 = vshrl.u32 %v562, 7
        %v564 = vsub.s32 5, %v563
        %v565 = vrot.slane %v498, %v564
        %v570 = vlaneseq
        %v571 = vshrl.u32 %v570, 7
        %v572 = vsub.s32 1, %v571
        %v573 = vrot.slane %v553, %v572
        %v574 = vlaneseq
        %v575 = vshrl.u32 %v574, 7
        %v576 = vsub.s32 1, %v575
        %v577 = vrot.slane %v557, %v576
        %v578 = vlaneseq
        %v579 = vshrl.u32 %v578, 7
        %v580 = vsub.s32 1, %v579
        %v581 = vrot.slane %v561, %v580
        %v582 = vlaneseq
        %v583 = vshrl.u32 %v582, 7
        %v584 = vsub.s32 1, %v583
        %v585 = vrot.slane %v565, %v584
        %v586 = vmul.f32 %v548, %v573
        %v587 = vmul.f32 %v548, %v577
        %v588 = vmul.f32 %v548, %v581
        %v589 = vmul.f32 %v548, %v585
        %v590 = vadd.f32 %v542, %v586
        %v591 = vadd.f32 %v543, %v587
        %v592 = vadd.f32 %v544, %v588
        %v593 = vadd.f32 %v545, %v589
        %594 = vset.pattern.permute.xlu0 2
        %595 = vperm.xlu0 %594, %v496
        %v596 = vpop.permute.xlu0 %595
        %v598 = vlaneseq
        %v599 = vshrl.u32 %v598, 7
        %v600 = vsub.s32 2, %v599
        %v601 = vrot.slane %v497, %v600
        %v602 = vlaneseq
        %v603 = vshrl.u32 %v602, 7
        %v604 = vsub.s32 6, %v603
        %v605 = vrot.slane %v497, %v604
        %v606 = vlaneseq
        %v607 = vshrl.u32 %v606, 7
        %v608 = vsub.s32 2, %v607
        %v609 = vrot.slane %v498, %v608
        %v610 = vlaneseq
        %v611 = vshrl.u32 %v610, 7
        %v612 = vsub.s32 6, %v611
        %v613 = vrot.slane %v498, %v612
        %v618 = vlaneseq
        %v619 = vshrl.u32 %v618, 7
        %v620 = vsub.s32 2, %v619
        %v621 = vrot.slane %v601, %v620
        %v622 = vlaneseq
        %v623 = vshrl.u32 %v622, 7
        %v624 = vsub.s32 2, %v623
        %v625 = vrot.slane %v605, %v624
        %v626 = vlaneseq
        %v627 = vshrl.u32 %v626, 7
        %v628 = vsub.s32 2, %v627
        %v629 = vrot.slane %v609, %v628
        %v630 = vlaneseq
        %v631 = vshrl.u32 %v630, 7
        %v632 = vsub.s32 2, %v631
        %v633 = vrot.slane %v613, %v632
        %v634 = vmul.f32 %v596, %v621
        %v635 = vmul.f32 %v596, %v625
        %v636 = vmul.f32 %v596, %v629
        %v637 = vmul.f32 %v596, %v633
        %v638 = vadd.f32 %v590, %v634
        %v639 = vadd.f32 %v591, %v635
        %v640 = vadd.f32 %v592, %v636
        %v641 = vadd.f32 %v593, %v637
        %v642 = vadd.f32 %v492, %v638
        %v643 = vadd.f32 %v493, %v639
        %v644 = vadd.f32 %v494, %v640
        %v645 = vadd.f32 %v495, %v641
        %v646 = vld [vmem:[%s4] sm:$0xff]
        %648 = vset.pattern.permute.xlu0 0
        %649 = vperm.xlu0 %648, %v646
        %v650 = vpop.permute.xlu0 %649
        %v652 = vadd.f32 %v642, %v650
        %v653 = vadd.f32 %v643, %v650
        %v654 = vadd.f32 %v644, %v650
        %v655 = vadd.f32 %v645, %v650
        %v656 = vtanh.pop %v652
        %v657 = vtanh.pop %v653
        %v658 = vtanh.pop %v654
        %v659 = vtanh.pop %v655
        %v660 = vld [vmem:[#allocation7] sm:$0xff]
        %v661 = vld [vmem:[#allocation7 + $0x8] sm:$0xff]
        %v662 = vld [vmem:[#allocation7 + $0x10] sm:$0xff]
        %v663 = vld [vmem:[#allocation7 + $0x18] sm:$0xff]
        %665 = vset.pattern.permute.xlu0 0
        %666 = vperm.xlu0 %665, %v660
        %v667 = vpop.permute.xlu0 %666
        %v669 = vlaneseq
        %v670 = vshrl.u32 %v669, 7
        %v671 = vsub.s32 0, %v670
        %v672 = vrot.slane %v656, %v671
        %v673 = vlaneseq
        %v674 = vshrl.u32 %v673, 7
        %v675 = vsub.s32 0, %v674
        %v676 = vrot.slane %v657, %v675
        %v677 = vlaneseq
        %v678 = vshrl.u32 %v677, 7
        %v679 = vsub.s32 0, %v678
        %v680 = vrot.slane %v658, %v679
        %v681 = vlaneseq
        %v682 = vshrl.u32 %v681, 7
        %v683 = vsub.s32 0, %v682
        %v684 = vrot.slane %v659, %v683
        %v685 = vmul.f32 %v667, %v672
        %v686 = vmul.f32 %v667, %v676
        %v687 = vmul.f32 %v667, %v680
        %v688 = vmul.f32 %v667, %v684
        %689 = vset.pattern.permute.xlu0 1
        %690 = vperm.xlu0 %689, %v660
        %v691 = vpop.permute.xlu0 %690
        %v693 = vlaneseq
        %v694 = vshrl.u32 %v693, 7
        %v695 = vsub.s32 1, %v694
        %v696 = vrot.slane %v656, %v695
        %v697 = vlaneseq
        %v698 = vshrl.u32 %v697, 7
        %v699 = vsub.s32 1, %v698
        %v700 = vrot.slane %v657, %v699
        %v701 = vlaneseq
        %v702 = vshrl.u32 %v701, 7
        %v703 = vsub.s32 1, %v702
        %v704 = vrot.slane %v658, %v703
        %v705 = vlaneseq
        %v706 = vshrl.u32 %v705, 7
        %v707 = vsub.s32 1, %v706
        %v708 = vrot.slane %v659, %v707
        %v709 = vmul.f32 %v691, %v696
        %v710 = vmul.f32 %v691, %v700
        %v711 = vmul.f32 %v691, %v704
        %v712 = vmul.f32 %v691, %v708
        %v713 = vadd.f32 %v685, %v709
        %v714 = vadd.f32 %v686, %v710
        %v715 = vadd.f32 %v687, %v711
        %v716 = vadd.f32 %v688, %v712
        %717 = vset.pattern.permute.xlu0 2
        %718 = vperm.xlu0 %717, %v660
        %v719 = vpop.permute.xlu0 %718
        %v721 = vlaneseq
        %v722 = vshrl.u32 %v721, 7
        %v723 = vsub.s32 2, %v722
        %v724 = vrot.slane %v656, %v723
        %v725 = vlaneseq
        %v726 = vshrl.u32 %v725, 7
        %v727 = vsub.s32 2, %v726
        %v728 = vrot.slane %v657, %v727
        %v729 = vlaneseq
        %v730 = vshrl.u32 %v729, 7
        %v731 = vsub.s32 2, %v730
        %v732 = vrot.slane %v658, %v731
        %v733 = vlaneseq
        %v734 = vshrl.u32 %v733, 7
        %v735 = vsub.s32 2, %v734
        %v736 = vrot.slane %v659, %v735
        %v737 = vmul.f32 %v719, %v724
        %v738 = vmul.f32 %v719, %v728
        %v739 = vmul.f32 %v719, %v732
        %v740 = vmul.f32 %v719, %v736
        %v741 = vadd.f32 %v713, %v737
        %v742 = vadd.f32 %v714, %v738
        %v743 = vadd.f32 %v715, %v739
        %v744 = vadd.f32 %v716, %v740
        %745 = vset.pattern.permute.xlu0 3
        %746 = vperm.xlu0 %745, %v660
        %v747 = vpop.permute.xlu0 %746
        %v749 = vlaneseq
        %v750 = vshrl.u32 %v749, 7
        %v751 = vsub.s32 3, %v750
        %v752 = vrot.slane %v656, %v751
        %v753 = vlaneseq
        %v754 = vshrl.u32 %v753, 7
        %v755 = vsub.s32 3, %v754
        %v756 = vrot.slane %v657, %v755
        %v757 = vlaneseq
        %v758 = vshrl.u32 %v757, 7
        %v759 = vsub.s32 3, %v758
        %v760 = vrot.slane %v658, %v759
        %v761 = vlaneseq
        %v762 = vshrl.u32 %v761, 7
        %v763 = vsub.s32 3, %v762
        %v764 = vrot.slane %v659, %v763
        %v765 = vmul.f32 %v747, %v752
        %v766 = vmul.f32 %v747, %v756
        %v767 = vmul.f32 %v747, %v760
        %v768 = vmul.f32 %v747, %v764
        %v769 = vadd.f32 %v741, %v765
        %v770 = vadd.f32 %v742, %v766
        %v771 = vadd.f32 %v743, %v767
        %v772 = vadd.f32 %v744, %v768
        %773 = vset.pattern.permute.xlu0 4
        %774 = vperm.xlu0 %773, %v660
        %v775 = vpop.permute.xlu0 %774
        %v777 = vlaneseq
        %v778 = vshrl.u32 %v777, 7
        %v779 = vsub.s32 4, %v778
        %v780 = vrot.slane %v656, %v779
        %v781 = vlaneseq
        %v782 = vshrl.u32 %v781, 7
        %v783 = vsub.s32 4, %v782
        %v784 = vrot.slane %v657, %v783
        %v785 = vlaneseq
        %v786 = vshrl.u32 %v785, 7
        %v787 = vsub.s32 4, %v786
        %v788 = vrot.slane %v658, %v787
        %v789 = vlaneseq
        %v790 = vshrl.u32 %v789, 7
        %v791 = vsub.s32 4, %v790
        %v792 = vrot.slane %v659, %v791
        %v793 = vmul.f32 %v775, %v780
        %v794 = vmul.f32 %v775, %v784
        %v795 = vmul.f32 %v775, %v788
        %v796 = vmul.f32 %v775, %v792
        %v797 = vadd.f32 %v769, %v793
        %v798 = vadd.f32 %v770, %v794
        %v799 = vadd.f32 %v771, %v795
        %v800 = vadd.f32 %v772, %v796
        %801 = vset.pattern.permute.xlu0 5
        %802 = vperm.xlu0 %801, %v660
        %v803 = vpop.permute.xlu0 %802
        %v805 = vlaneseq
        %v806 = vshrl.u32 %v805, 7
        %v807 = vsub.s32 5, %v806
        %v808 = vrot.slane %v656, %v807
        %v809 = vlaneseq
        %v810 = vshrl.u32 %v809, 7
        %v811 = vsub.s32 5, %v810
        %v812 = vrot.slane %v657, %v811
        %v813 = vlaneseq
        %v814 = vshrl.u32 %v813, 7
        %v815 = vsub.s32 5, %v814
        %v816 = vrot.slane %v658, %v815
        %v817 = vlaneseq
        %v818 = vshrl.u32 %v817, 7
        %v819 = vsub.s32 5, %v818
        %v820 = vrot.slane %v659, %v819
        %v821 = vmul.f32 %v803, %v808
        %v822 = vmul.f32 %v803, %v812
        %v823 = vmul.f32 %v803, %v816
        %v824 = vmul.f32 %v803, %v820
        %v825 = vadd.f32 %v797, %v821
        %v826 = vadd.f32 %v798, %v822
        %v827 = vadd.f32 %v799, %v823
        %v828 = vadd.f32 %v800, %v824
        %829 = vset.pattern.permute.xlu0 6
        %830 = vperm.xlu0 %829, %v660
        %v831 = vpop.permute.xlu0 %830
        %v833 = vlaneseq
        %v834 = vshrl.u32 %v833, 7
        %v835 = vsub.s32 6, %v834
        %v836 = vrot.slane %v656, %v835
        %v837 = vlaneseq
        %v838 = vshrl.u32 %v837, 7
        %v839 = vsub.s32 6, %v838
        %v840 = vrot.slane %v657, %v839
        %v841 = vlaneseq
        %v842 = vshrl.u32 %v841, 7
        %v843 = vsub.s32 6, %v842
        %v844 = vrot.slane %v658, %v843
        %v845 = vlaneseq
        %v846 = vshrl.u32 %v845, 7
        %v847 = vsub.s32 6, %v846
        %v848 = vrot.slane %v659, %v847
        %v849 = vmul.f32 %v831, %v836
        %v850 = vmul.f32 %v831, %v840
        %v851 = vmul.f32 %v831, %v844
        %v852 = vmul.f32 %v831, %v848
        %v853 = vadd.f32 %v825, %v849
        %v854 = vadd.f32 %v826, %v850
        %v855 = vadd.f32 %v827, %v851
        %v856 = vadd.f32 %v828, %v852
        %857 = vset.pattern.permute.xlu0 7
        %858 = vperm.xlu0 %857, %v660
        %v859 = vpop.permute.xlu0 %858
        %v861 = vlaneseq
        %v862 = vshrl.u32 %v861, 7
        %v863 = vsub.s32 7, %v862
        %v864 = vrot.slane %v656, %v863
        %v865 = vlaneseq
        %v866 = vshrl.u32 %v865, 7
        %v867 = vsub.s32 7, %v866
        %v868 = vrot.slane %v657, %v867
        %v869 = vlaneseq
        %v870 = vshrl.u32 %v869, 7
        %v871 = vsub.s32 7, %v870
        %v872 = vrot.slane %v658, %v871
        %v873 = vlaneseq
        %v874 = vshrl.u32 %v873, 7
        %v875 = vsub.s32 7, %v874
        %v876 = vrot.slane %v659, %v875
        %v877 = vmul.f32 %v859, %v864
        %v878 = vmul.f32 %v859, %v868
        %v879 = vmul.f32 %v859, %v872
        %v880 = vmul.f32 %v859, %v876
        %v881 = vadd.f32 %v853, %v877
        %v882 = vadd.f32 %v854, %v878
        %v883 = vadd.f32 %v855, %v879
        %v884 = vadd.f32 %v856, %v880
        %v885 = vtanh.pop %v881
        %v886 = vtanh.pop %v882
        %v887 = vtanh.pop %v883
        %v888 = vtanh.pop %v884
        %890 = vset.pattern.permute.xlu0 0
        %891 = vperm.xlu0 %890, %v661
        %v892 = vpop.permute.xlu0 %891
        %v894 = vlaneseq
        %v895 = vshrl.u32 %v894, 7
        %v896 = vsub.s32 0, %v895
        %v897 = vrot.slane %v885, %v896
        %v898 = vlaneseq
        %v899 = vshrl.u32 %v898, 7
        %v900 = vsub.s32 0, %v899
        %v901 = vrot.slane %v886, %v900
        %v902 = vlaneseq
        %v903 = vshrl.u32 %v902, 7
        %v904 = vsub.s32 0, %v903
        %v905 = vrot.slane %v887, %v904
        %v906 = vlaneseq
        %v907 = vshrl.u32 %v906, 7
        %v908 = vsub.s32 0, %v907
        %v909 = vrot.slane %v888, %v908
        %v910 = vmul.f32 %v892, %v897
        %v911 = vmul.f32 %v892, %v901
        %v912 = vmul.f32 %v892, %v905
        %v913 = vmul.f32 %v892, %v909
        %914 = vset.pattern.permute.xlu0 1
        %915 = vperm.xlu0 %914, %v661
        %v916 = vpop.permute.xlu0 %915
        %v918 = vlaneseq
        %v919 = vshrl.u32 %v918, 7
        %v920 = vsub.s32 1, %v919
        %v921 = vrot.slane %v885, %v920
        %v922 = vlaneseq
        %v923 = vshrl.u32 %v922, 7
        %v924 = vsub.s32 1, %v923
        %v925 = vrot.slane %v886, %v924
        %v926 = vlaneseq
        %v927 = vshrl.u32 %v926, 7
        %v928 = vsub.s32 1, %v927
        %v929 = vrot.slane %v887, %v928
        %v930 = vlaneseq
        %v931 = vshrl.u32 %v930, 7
        %v932 = vsub.s32 1, %v931
        %v933 = vrot.slane %v888, %v932
        %v934 = vmul.f32 %v916, %v921
        %v935 = vmul.f32 %v916, %v925
        %v936 = vmul.f32 %v916, %v929
        %v937 = vmul.f32 %v916, %v933
        %v938 = vadd.f32 %v910, %v934
        %v939 = vadd.f32 %v911, %v935
        %v940 = vadd.f32 %v912, %v936
        %v941 = vadd.f32 %v913, %v937
        %942 = vset.pattern.permute.xlu0 2
        %943 = vperm.xlu0 %942, %v661
        %v944 = vpop.permute.xlu0 %943
        %v946 = vlaneseq
        %v947 = vshrl.u32 %v946, 7
        %v948 = vsub.s32 2, %v947
        %v949 = vrot.slane %v885, %v948
        %v950 = vlaneseq
        %v951 = vshrl.u32 %v950, 7
        %v952 = vsub.s32 2, %v951
        %v953 = vrot.slane %v886, %v952
        %v954 = vlaneseq
        %v955 = vshrl.u32 %v954, 7
        %v956 = vsub.s32 2, %v955
        %v957 = vrot.slane %v887, %v956
        %v958 = vlaneseq
        %v959 = vshrl.u32 %v958, 7
        %v960 = vsub.s32 2, %v959
        %v961 = vrot.slane %v888, %v960
        %v962 = vmul.f32 %v944, %v949
        %v963 = vmul.f32 %v944, %v953
        %v964 = vmul.f32 %v944, %v957
        %v965 = vmul.f32 %v944, %v961
        %v966 = vadd.f32 %v938, %v962
        %v967 = vadd.f32 %v939, %v963
        %v968 = vadd.f32 %v940, %v964
        %v969 = vadd.f32 %v941, %v965
        %970 = vset.pattern.permute.xlu0 3
        %971 = vperm.xlu0 %970, %v661
        %v972 = vpop.permute.xlu0 %971
        %v974 = vlaneseq
        %v975 = vshrl.u32 %v974, 7
        %v976 = vsub.s32 3, %v975
        %v977 = vrot.slane %v885, %v976
        %v978 = vlaneseq
        %v979 = vshrl.u32 %v978, 7
        %v980 = vsub.s32 3, %v979
        %v981 = vrot.slane %v886, %v980
        %v982 = vlaneseq
        %v983 = vshrl.u32 %v982, 7
        %v984 = vsub.s32 3, %v983
        %v985 = vrot.slane %v887, %v984
        %v986 = vlaneseq
        %v987 = vshrl.u32 %v986, 7
        %v988 = vsub.s32 3, %v987
        %v989 = vrot.slane %v888, %v988
        %v990 = vmul.f32 %v972, %v977
        %v991 = vmul.f32 %v972, %v981
        %v992 = vmul.f32 %v972, %v985
        %v993 = vmul.f32 %v972, %v989
        %v994 = vadd.f32 %v966, %v990
        %v995 = vadd.f32 %v967, %v991
        %v996 = vadd.f32 %v968, %v992
        %v997 = vadd.f32 %v969, %v993
        %998 = vset.pattern.permute.xlu0 4
        %999 = vperm.xlu0 %998, %v661
        %v1000 = vpop.permute.xlu0 %999
        %v1002 = vlaneseq
        %v1003 = vshrl.u32 %v1002, 7
        %v1004 = vsub.s32 4, %v1003
        %v1005 = vrot.slane %v885, %v1004
        %v1006 = vlaneseq
        %v1007 = vshrl.u32 %v1006, 7
        %v1008 = vsub.s32 4, %v1007
        %v1009 = vrot.slane %v886, %v1008
        %v1010 = vlaneseq
        %v1011 = vshrl.u32 %v1010, 7
        %v1012 = vsub.s32 4, %v1011
        %v1013 = vrot.slane %v887, %v1012
        %v1014 = vlaneseq
        %v1015 = vshrl.u32 %v1014, 7
        %v1016 = vsub.s32 4, %v1015
        %v1017 = vrot.slane %v888, %v1016
        %v1018 = vmul.f32 %v1000, %v1005
        %v1019 = vmul.f32 %v1000, %v1009
        %v1020 = vmul.f32 %v1000, %v1013
        %v1021 = vmul.f32 %v1000, %v1017
        %v1022 = vadd.f32 %v994, %v1018
        %v1023 = vadd.f32 %v995, %v1019
        %v1024 = vadd.f32 %v996, %v1020
        %v1025 = vadd.f32 %v997, %v1021
        %1026 = vset.pattern.permute.xlu0 5
        %1027 = vperm.xlu0 %1026, %v661
        %v1028 = vpop.permute.xlu0 %1027
        %v1030 = vlaneseq
        %v1031 = vshrl.u32 %v1030, 7
        %v1032 = vsub.s32 5, %v1031
        %v1033 = vrot.slane %v885, %v1032
        %v1034 = vlaneseq
        %v1035 = vshrl.u32 %v1034, 7
        %v1036 = vsub.s32 5, %v1035
        %v1037 = vrot.slane %v886, %v1036
        %v1038 = vlaneseq
        %v1039 = vshrl.u32 %v1038, 7
        %v1040 = vsub.s32 5, %v1039
        %v1041 = vrot.slane %v887, %v1040
        %v1042 = vlaneseq
        %v1043 = vshrl.u32 %v1042, 7
        %v1044 = vsub.s32 5, %v1043
        %v1045 = vrot.slane %v888, %v1044
        %v1046 = vmul.f32 %v1028, %v1033
        %v1047 = vmul.f32 %v1028, %v1037
        %v1048 = vmul.f32 %v1028, %v1041
        %v1049 = vmul.f32 %v1028, %v1045
        %v1050 = vadd.f32 %v1022, %v1046
        %v1051 = vadd.f32 %v1023, %v1047
        %v1052 = vadd.f32 %v1024, %v1048
        %v1053 = vadd.f32 %v1025, %v1049
        %1054 = vset.pattern.permute.xlu0 6
        %1055 = vperm.xlu0 %1054, %v661
        %v1056 = vpop.permute.xlu0 %1055
        %v1058 = vlaneseq
        %v1059 = vshrl.u32 %v1058, 7
        %v1060 = vsub.s32 6, %v1059
        %v1061 = vrot.slane %v885, %v1060
        %v1062 = vlaneseq
        %v1063 = vshrl.u32 %v1062, 7
        %v1064 = vsub.s32 6, %v1063
        %v1065 = vrot.slane %v886, %v1064
        %v1066 = vlaneseq
        %v1067 = vshrl.u32 %v1066, 7
        %v1068 = vsub.s32 6, %v1067
        %v1069 = vrot.slane %v887, %v1068
        %v1070 = vlaneseq
        %v1071 = vshrl.u32 %v1070, 7
        %v1072 = vsub.s32 6, %v1071
        %v1073 = vrot.slane %v888, %v1072
        %v1074 = vmul.f32 %v1056, %v1061
        %v1075 = vmul.f32 %v1056, %v1065
        %v1076 = vmul.f32 %v1056, %v1069
        %v1077 = vmul.f32 %v1056, %v1073
        %v1078 = vadd.f32 %v1050, %v1074
        %v1079 = vadd.f32 %v1051, %v1075
        %v1080 = vadd.f32 %v1052, %v1076
        %v1081 = vadd.f32 %v1053, %v1077
        %1082 = vset.pattern.permute.xlu0 7
        %1083 = vperm.xlu0 %1082, %v661
        %v1084 = vpop.permute.xlu0 %1083
        %v1086 = vlaneseq
        %v1087 = vshrl.u32 %v1086, 7
        %v1088 = vsub.s32 7, %v1087
        %v1089 = vrot.slane %v885, %v1088
        %v1090 = vlaneseq
        %v1091 = vshrl.u32 %v1090, 7
        %v1092 = vsub.s32 7, %v1091
        %v1093 = vrot.slane %v886, %v1092
        %v1094 = vlaneseq
        %v1095 = vshrl.u32 %v1094, 7
        %v1096 = vsub.s32 7, %v1095
        %v1097 = vrot.slane %v887, %v1096
        %v1098 = vlaneseq
        %v1099 = vshrl.u32 %v1098, 7
        %v1100 = vsub.s32 7, %v1099
        %v1101 = vrot.slane %v888, %v1100
        %v1102 = vmul.f32 %v1084, %v1089
        %v1103 = vmul.f32 %v1084, %v1093
        %v1104 = vmul.f32 %v1084, %v1097
        %v1105 = vmul.f32 %v1084, %v1101
        %v1106 = vadd.f32 %v1078, %v1102
        %v1107 = vadd.f32 %v1079, %v1103
        %v1108 = vadd.f32 %v1080, %v1104
        %v1109 = vadd.f32 %v1081, %v1105
        %v1110 = vtanh.pop %v1106
        %v1111 = vtanh.pop %v1107
        %v1112 = vtanh.pop %v1108
        %v1113 = vtanh.pop %v1109
        %1115 = vset.pattern.permute.xlu0 0
        %1116 = vperm.xlu0 %1115, %v662
        %v1117 = vpop.permute.xlu0 %1116
        %v1119 = vlaneseq
        %v1120 = vshrl.u32 %v1119, 7
        %v1121 = vsub.s32 0, %v1120
        %v1122 = vrot.slane %v1110, %v1121
        %v1123 = vlaneseq
        %v1124 = vshrl.u32 %v1123, 7
        %v1125 = vsub.s32 0, %v1124
        %v1126 = vrot.slane %v1111, %v1125
        %v1127 = vlaneseq
        %v1128 = vshrl.u32 %v1127, 7
        %v1129 = vsub.s32 0, %v1128
        %v1130 = vrot.slane %v1112, %v1129
        %v1131 = vlaneseq
        %v1132 = vshrl.u32 %v1131, 7
        %v1133 = vsub.s32 0, %v1132
        %v1134 = vrot.slane %v1113, %v1133
        %v1135 = vmul.f32 %v1117, %v1122
        %v1136 = vmul.f32 %v1117, %v1126
        %v1137 = vmul.f32 %v1117, %v1130
        %v1138 = vmul.f32 %v1117, %v1134
        %1139 = vset.pattern.permute.xlu0 1
        %1140 = vperm.xlu0 %1139, %v662
        %v1141 = vpop.permute.xlu0 %1140
        %v1143 = vlaneseq
        %v1144 = vshrl.u32 %v1143, 7
        %v1145 = vsub.s32 1, %v1144
        %v1146 = vrot.slane %v1110, %v1145
        %v1147 = vlaneseq
        %v1148 = vshrl.u32 %v1147, 7
        %v1149 = vsub.s32 1, %v1148
        %v1150 = vrot.slane %v1111, %v1149
        %v1151 = vlaneseq
        %v1152 = vshrl.u32 %v1151, 7
        %v1153 = vsub.s32 1, %v1152
        %v1154 = vrot.slane %v1112, %v1153
        %v1155 = vlaneseq
        %v1156 = vshrl.u32 %v1155, 7
        %v1157 = vsub.s32 1, %v1156
        %v1158 = vrot.slane %v1113, %v1157
        %v1159 = vmul.f32 %v1141, %v1146
        %v1160 = vmul.f32 %v1141, %v1150
        %v1161 = vmul.f32 %v1141, %v1154
        %v1162 = vmul.f32 %v1141, %v1158
        %v1163 = vadd.f32 %v1135, %v1159
        %v1164 = vadd.f32 %v1136, %v1160
        %v1165 = vadd.f32 %v1137, %v1161
        %v1166 = vadd.f32 %v1138, %v1162
        %1167 = vset.pattern.permute.xlu0 2
        %1168 = vperm.xlu0 %1167, %v662
        %v1169 = vpop.permute.xlu0 %1168
        %v1171 = vlaneseq
        %v1172 = vshrl.u32 %v1171, 7
        %v1173 = vsub.s32 2, %v1172
        %v1174 = vrot.slane %v1110, %v1173
        %v1175 = vlaneseq
        %v1176 = vshrl.u32 %v1175, 7
        %v1177 = vsub.s32 2, %v1176
        %v1178 = vrot.slane %v1111, %v1177
        %v1179 = vlaneseq
        %v1180 = vshrl.u32 %v1179, 7
        %v1181 = vsub.s32 2, %v1180
        %v1182 = vrot.slane %v1112, %v1181
        %v1183 = vlaneseq
        %v1184 = vshrl.u32 %v1183, 7
        %v1185 = vsub.s32 2, %v1184
        %v1186 = vrot.slane %v1113, %v1185
        %v1187 = vmul.f32 %v1169, %v1174
        %v1188 = vmul.f32 %v1169, %v1178
        %v1189 = vmul.f32 %v1169, %v1182
        %v1190 = vmul.f32 %v1169, %v1186
        %v1191 = vadd.f32 %v1163, %v1187
        %v1192 = vadd.f32 %v1164, %v1188
        %v1193 = vadd.f32 %v1165, %v1189
        %v1194 = vadd.f32 %v1166, %v1190
        %1195 = vset.pattern.permute.xlu0 3
        %1196 = vperm.xlu0 %1195, %v662
        %v1197 = vpop.permute.xlu0 %1196
        %v1199 = vlaneseq
        %v1200 = vshrl.u32 %v1199, 7
        %v1201 = vsub.s32 3, %v1200
        %v1202 = vrot.slane %v1110, %v1201
        %v1203 = vlaneseq
        %v1204 = vshrl.u32 %v1203, 7
        %v1205 = vsub.s32 3, %v1204
        %v1206 = vrot.slane %v1111, %v1205
        %v1207 = vlaneseq
        %v1208 = vshrl.u32 %v1207, 7
        %v1209 = vsub.s32 3, %v1208
        %v1210 = vrot.slane %v1112, %v1209
        %v1211 = vlaneseq
        %v1212 = vshrl.u32 %v1211, 7
        %v1213 = vsub.s32 3, %v1212
        %v1214 = vrot.slane %v1113, %v1213
        %v1215 = vmul.f32 %v1197, %v1202
        %v1216 = vmul.f32 %v1197, %v1206
        %v1217 = vmul.f32 %v1197, %v1210
        %v1218 = vmul.f32 %v1197, %v1214
        %v1219 = vadd.f32 %v1191, %v1215
        %v1220 = vadd.f32 %v1192, %v1216
        %v1221 = vadd.f32 %v1193, %v1217
        %v1222 = vadd.f32 %v1194, %v1218
        %1223 = vset.pattern.permute.xlu0 4
        %1224 = vperm.xlu0 %1223, %v662
        %v1225 = vpop.permute.xlu0 %1224
        %v1227 = vlaneseq
        %v1228 = vshrl.u32 %v1227, 7
        %v1229 = vsub.s32 4, %v1228
        %v1230 = vrot.slane %v1110, %v1229
        %v1231 = vlaneseq
        %v1232 = vshrl.u32 %v1231, 7
        %v1233 = vsub.s32 4, %v1232
        %v1234 = vrot.slane %v1111, %v1233
        %v1235 = vlaneseq
        %v1236 = vshrl.u32 %v1235, 7
        %v1237 = vsub.s32 4, %v1236
        %v1238 = vrot.slane %v1112, %v1237
        %v1239 = vlaneseq
        %v1240 = vshrl.u32 %v1239, 7
        %v1241 = vsub.s32 4, %v1240
        %v1242 = vrot.slane %v1113, %v1241
        %v1243 = vmul.f32 %v1225, %v1230
        %v1244 = vmul.f32 %v1225, %v1234
        %v1245 = vmul.f32 %v1225, %v1238
        %v1246 = vmul.f32 %v1225, %v1242
        %v1247 = vadd.f32 %v1219, %v1243
        %v1248 = vadd.f32 %v1220, %v1244
        %v1249 = vadd.f32 %v1221, %v1245
        %v1250 = vadd.f32 %v1222, %v1246
        %1251 = vset.pattern.permute.xlu0 5
        %1252 = vperm.xlu0 %1251, %v662
        %v1253 = vpop.permute.xlu0 %1252
        %v1255 = vlaneseq
        %v1256 = vshrl.u32 %v1255, 7
        %v1257 = vsub.s32 5, %v1256
        %v1258 = vrot.slane %v1110, %v1257
        %v1259 = vlaneseq
        %v1260 = vshrl.u32 %v1259, 7
        %v1261 = vsub.s32 5, %v1260
        %v1262 = vrot.slane %v1111, %v1261
        %v1263 = vlaneseq
        %v1264 = vshrl.u32 %v1263, 7
        %v1265 = vsub.s32 5, %v1264
        %v1266 = vrot.slane %v1112, %v1265
        %v1267 = vlaneseq
        %v1268 = vshrl.u32 %v1267, 7
        %v1269 = vsub.s32 5, %v1268
        %v1270 = vrot.slane %v1113, %v1269
        %v1271 = vmul.f32 %v1253, %v1258
        %v1272 = vmul.f32 %v1253, %v1262
        %v1273 = vmul.f32 %v1253, %v1266
        %v1274 = vmul.f32 %v1253, %v1270
        %v1275 = vadd.f32 %v1247, %v1271
        %v1276 = vadd.f32 %v1248, %v1272
        %v1277 = vadd.f32 %v1249, %v1273
        %v1278 = vadd.f32 %v1250, %v1274
        %1279 = vset.pattern.permute.xlu0 6
        %1280 = vperm.xlu0 %1279, %v662
        %v1281 = vpop.permute.xlu0 %1280
        %v1283 = vlaneseq
        %v1284 = vshrl.u32 %v1283, 7
        %v1285 = vsub.s32 6, %v1284
        %v1286 = vrot.slane %v1110, %v1285
        %v1287 = vlaneseq
        %v1288 = vshrl.u32 %v1287, 7
        %v1289 = vsub.s32 6, %v1288
        %v1290 = vrot.slane %v1111, %v1289
        %v1291 = vlaneseq
        %v1292 = vshrl.u32 %v1291, 7
        %v1293 = vsub.s32 6, %v1292
        %v1294 = vrot.slane %v1112, %v1293
        %v1295 = vlaneseq
        %v1296 = vshrl.u32 %v1295, 7
        %v1297 = vsub.s32 6, %v1296
        %v1298 = vrot.slane %v1113, %v1297
        %v1299 = vmul.f32 %v1281, %v1286
        %v1300 = vmul.f32 %v1281, %v1290
        %v1301 = vmul.f32 %v1281, %v1294
        %v1302 = vmul.f32 %v1281, %v1298
        %v1303 = vadd.f32 %v1275, %v1299
        %v1304 = vadd.f32 %v1276, %v1300
        %v1305 = vadd.f32 %v1277, %v1301
        %v1306 = vadd.f32 %v1278, %v1302
        %1307 = vset.pattern.permute.xlu0 7
        %1308 = vperm.xlu0 %1307, %v662
        %v1309 = vpop.permute.xlu0 %1308
        %v1311 = vlaneseq
        %v1312 = vshrl.u32 %v1311, 7
        %v1313 = vsub.s32 7, %v1312
        %v1314 = vrot.slane %v1110, %v1313
        %v1315 = vlaneseq
        %v1316 = vshrl.u32 %v1315, 7
        %v1317 = vsub.s32 7, %v1316
        %v1318 = vrot.slane %v1111, %v1317
        %v1319 = vlaneseq
        %v1320 = vshrl.u32 %v1319, 7
        %v1321 = vsub.s32 7, %v1320
        %v1322 = vrot.slane %v1112, %v1321
        %v1323 = vlaneseq
        %v1324 = vshrl.u32 %v1323, 7
        %v1325 = vsub.s32 7, %v1324
        %v1326 = vrot.slane %v1113, %v1325
        %v1327 = vmul.f32 %v1309, %v1314
        %v1328 = vmul.f32 %v1309, %v1318
        %v1329 = vmul.f32 %v1309, %v1322
        %v1330 = vmul.f32 %v1309, %v1326
        %v1331 = vadd.f32 %v1303, %v1327
        %v1332 = vadd.f32 %v1304, %v1328
        %v1333 = vadd.f32 %v1305, %v1329
        %v1334 = vadd.f32 %v1306, %v1330
        %v1335 = vtanh.pop %v1331
        %v1336 = vtanh.pop %v1332
        %v1337 = vtanh.pop %v1333
        %v1338 = vtanh.pop %v1334
        %1340 = vset.pattern.permute.xlu0 0
        %1341 = vperm.xlu0 %1340, %v663
        %v1342 = vpop.permute.xlu0 %1341
        %v1344 = vlaneseq
        %v1345 = vshrl.u32 %v1344, 7
        %v1346 = vsub.s32 0, %v1345
        %v1347 = vrot.slane %v1335, %v1346
        %v1348 = vlaneseq
        %v1349 = vshrl.u32 %v1348, 7
        %v1350 = vsub.s32 0, %v1349
        %v1351 = vrot.slane %v1336, %v1350
        %v1352 = vlaneseq
        %v1353 = vshrl.u32 %v1352, 7
        %v1354 = vsub.s32 0, %v1353
        %v1355 = vrot.slane %v1337, %v1354
        %v1356 = vlaneseq
        %v1357 = vshrl.u32 %v1356, 7
        %v1358 = vsub.s32 0, %v1357
        %v1359 = vrot.slane %v1338, %v1358
        %v1360 = vmul.f32 %v1342, %v1347
        %v1361 = vmul.f32 %v1342, %v1351
        %v1362 = vmul.f32 %v1342, %v1355
        %v1363 = vmul.f32 %v1342, %v1359
        %1364 = vset.pattern.permute.xlu0 1
        %1365 = vperm.xlu0 %1364, %v663
        %v1366 = vpop.permute.xlu0 %1365
        %v1368 = vlaneseq
        %v1369 = vshrl.u32 %v1368, 7
        %v1370 = vsub.s32 1, %v1369
        %v1371 = vrot.slane %v1335, %v1370
        %v1372 = vlaneseq
        %v1373 = vshrl.u32 %v1372, 7
        %v1374 = vsub.s32 1, %v1373
        %v1375 = vrot.slane %v1336, %v1374
        %v1376 = vlaneseq
        %v1377 = vshrl.u32 %v1376, 7
        %v1378 = vsub.s32 1, %v1377
        %v1379 = vrot.slane %v1337, %v1378
        %v1380 = vlaneseq
        %v1381 = vshrl.u32 %v1380, 7
        %v1382 = vsub.s32 1, %v1381
        %v1383 = vrot.slane %v1338, %v1382
        %v1384 = vmul.f32 %v1366, %v1371
        %v1385 = vmul.f32 %v1366, %v1375
        %v1386 = vmul.f32 %v1366, %v1379
        %v1387 = vmul.f32 %v1366, %v1383
        %v1388 = vadd.f32 %v1360, %v1384
        %v1389 = vadd.f32 %v1361, %v1385
        %v1390 = vadd.f32 %v1362, %v1386
        %v1391 = vadd.f32 %v1363, %v1387
        %1392 = vset.pattern.permute.xlu0 2
        %1393 = vperm.xlu0 %1392, %v663
        %v1394 = vpop.permute.xlu0 %1393
        %v1396 = vlaneseq
        %v1397 = vshrl.u32 %v1396, 7
        %v1398 = vsub.s32 2, %v1397
        %v1399 = vrot.slane %v1335, %v1398
        %v1400 = vlaneseq
        %v1401 = vshrl.u32 %v1400, 7
        %v1402 = vsub.s32 2, %v1401
        %v1403 = vrot.slane %v1336, %v1402
        %v1404 = vlaneseq
        %v1405 = vshrl.u32 %v1404, 7
        %v1406 = vsub.s32 2, %v1405
        %v1407 = vrot.slane %v1337, %v1406
        %v1408 = vlaneseq
        %v1409 = vshrl.u32 %v1408, 7
        %v1410 = vsub.s32 2, %v1409
        %v1411 = vrot.slane %v1338, %v1410
        %v1412 = vmul.f32 %v1394, %v1399
        %v1413 = vmul.f32 %v1394, %v1403
        %v1414 = vmul.f32 %v1394, %v1407
        %v1415 = vmul.f32 %v1394, %v1411
        %v1416 = vadd.f32 %v1388, %v1412
        %v1417 = vadd.f32 %v1389, %v1413
        %v1418 = vadd.f32 %v1390, %v1414
        %v1419 = vadd.f32 %v1391, %v1415
        %1420 = vset.pattern.permute.xlu0 3
        %1421 = vperm.xlu0 %1420, %v663
        %v1422 = vpop.permute.xlu0 %1421
        %v1424 = vlaneseq
        %v1425 = vshrl.u32 %v1424, 7
        %v1426 = vsub.s32 3, %v1425
        %v1427 = vrot.slane %v1335, %v1426
        %v1428 = vlaneseq
        %v1429 = vshrl.u32 %v1428, 7
        %v1430 = vsub.s32 3, %v1429
        %v1431 = vrot.slane %v1336, %v1430
        %v1432 = vlaneseq
        %v1433 = vshrl.u32 %v1432, 7
        %v1434 = vsub.s32 3, %v1433
        %v1435 = vrot.slane %v1337, %v1434
        %v1436 = vlaneseq
        %v1437 = vshrl.u32 %v1436, 7
        %v1438 = vsub.s32 3, %v1437
        %v1439 = vrot.slane %v1338, %v1438
        %v1440 = vmul.f32 %v1422, %v1427
        %v1441 = vmul.f32 %v1422, %v1431
        %v1442 = vmul.f32 %v1422, %v1435
        %v1443 = vmul.f32 %v1422, %v1439
        %v1444 = vadd.f32 %v1416, %v1440
        %v1445 = vadd.f32 %v1417, %v1441
        %v1446 = vadd.f32 %v1418, %v1442
        %v1447 = vadd.f32 %v1419, %v1443
        %1448 = vset.pattern.permute.xlu0 4
        %1449 = vperm.xlu0 %1448, %v663
        %v1450 = vpop.permute.xlu0 %1449
        %v1452 = vlaneseq
        %v1453 = vshrl.u32 %v1452, 7
        %v1454 = vsub.s32 4, %v1453
        %v1455 = vrot.slane %v1335, %v1454
        %v1456 = vlaneseq
        %v1457 = vshrl.u32 %v1456, 7
        %v1458 = vsub.s32 4, %v1457
        %v1459 = vrot.slane %v1336, %v1458
        %v1460 = vlaneseq
        %v1461 = vshrl.u32 %v1460, 7
        %v1462 = vsub.s32 4, %v1461
        %v1463 = vrot.slane %v1337, %v1462
        %v1464 = vlaneseq
        %v1465 = vshrl.u32 %v1464, 7
        %v1466 = vsub.s32 4, %v1465
        %v1467 = vrot.slane %v1338, %v1466
        %v1468 = vmul.f32 %v1450, %v1455
        %v1469 = vmul.f32 %v1450, %v1459
        %v1470 = vmul.f32 %v1450, %v1463
        %v1471 = vmul.f32 %v1450, %v1467
        %v1472 = vadd.f32 %v1444, %v1468
        %v1473 = vadd.f32 %v1445, %v1469
        %v1474 = vadd.f32 %v1446, %v1470
        %v1475 = vadd.f32 %v1447, %v1471
        %1476 = vset.pattern.permute.xlu0 5
        %1477 = vperm.xlu0 %1476, %v663
        %v1478 = vpop.permute.xlu0 %1477
        %v1480 = vlaneseq
        %v1481 = vshrl.u32 %v1480, 7
        %v1482 = vsub.s32 5, %v1481
        %v1483 = vrot.slane %v1335, %v1482
        %v1484 = vlaneseq
        %v1485 = vshrl.u32 %v1484, 7
        %v1486 = vsub.s32 5, %v1485
        %v1487 = vrot.slane %v1336, %v1486
        %v1488 = vlaneseq
        %v1489 = vshrl.u32 %v1488, 7
        %v1490 = vsub.s32 5, %v1489
        %v1491 = vrot.slane %v1337, %v1490
        %v1492 = vlaneseq
        %v1493 = vshrl.u32 %v1492, 7
        %v1494 = vsub.s32 5, %v1493
        %v1495 = vrot.slane %v1338, %v1494
        %v1496 = vmul.f32 %v1478, %v1483
        %v1497 = vmul.f32 %v1478, %v1487
        %v1498 = vmul.f32 %v1478, %v1491
        %v1499 = vmul.f32 %v1478, %v1495
        %v1500 = vadd.f32 %v1472, %v1496
        %v1501 = vadd.f32 %v1473, %v1497
        %v1502 = vadd.f32 %v1474, %v1498
        %v1503 = vadd.f32 %v1475, %v1499
        %1504 = vset.pattern.permute.xlu0 6
        %1505 = vperm.xlu0 %1504, %v663
        %v1506 = vpop.permute.xlu0 %1505
        %v1508 = vlaneseq
        %v1509 = vshrl.u32 %v1508, 7
        %v1510 = vsub.s32 6, %v1509
        %v1511 = vrot.slane %v1335, %v1510
        %v1512 = vlaneseq
        %v1513 = vshrl.u32 %v1512, 7
        %v1514 = vsub.s32 6, %v1513
        %v1515 = vrot.slane %v1336, %v1514
        %v1516 = vlaneseq
        %v1517 = vshrl.u32 %v1516, 7
        %v1518 = vsub.s32 6, %v1517
        %v1519 = vrot.slane %v1337, %v1518
        %v1520 = vlaneseq
        %v1521 = vshrl.u32 %v1520, 7
        %v1522 = vsub.s32 6, %v1521
        %v1523 = vrot.slane %v1338, %v1522
        %v1524 = vmul.f32 %v1506, %v1511
        %v1525 = vmul.f32 %v1506, %v1515
        %v1526 = vmul.f32 %v1506, %v1519
        %v1527 = vmul.f32 %v1506, %v1523
        %v1528 = vadd.f32 %v1500, %v1524
        %v1529 = vadd.f32 %v1501, %v1525
        %v1530 = vadd.f32 %v1502, %v1526
        %v1531 = vadd.f32 %v1503, %v1527
        %1532 = vset.pattern.permute.xlu0 7
        %1533 = vperm.xlu0 %1532, %v663
        %v1534 = vpop.permute.xlu0 %1533
        %v1536 = vlaneseq
        %v1537 = vshrl.u32 %v1536, 7
        %v1538 = vsub.s32 7, %v1537
        %v1539 = vrot.slane %v1335, %v1538
        %v1540 = vlaneseq
        %v1541 = vshrl.u32 %v1540, 7
        %v1542 = vsub.s32 7, %v1541
        %v1543 = vrot.slane %v1336, %v1542
        %v1544 = vlaneseq
        %v1545 = vshrl.u32 %v1544, 7
        %v1546 = vsub.s32 7, %v1545
        %v1547 = vrot.slane %v1337, %v1546
        %v1548 = vlaneseq
        %v1549 = vshrl.u32 %v1548, 7
        %v1550 = vsub.s32 7, %v1549
        %v1551 = vrot.slane %v1338, %v1550
        %v1552 = vmul.f32 %v1534, %v1539
        %v1553 = vmul.f32 %v1534, %v1543
        %v1554 = vmul.f32 %v1534, %v1547
        %v1555 = vmul.f32 %v1534, %v1551
        %v1556 = vadd.f32 %v1528, %v1552
        %v1557 = vadd.f32 %v1529, %v1553
        %v1558 = vadd.f32 %v1530, %v1554
        %v1559 = vadd.f32 %v1531, %v1555
        %v1560 = vtanh.pop %v1556
        %v1561 = vtanh.pop %v1557
        %v1562 = vtanh.pop %v1558
        %v1563 = vtanh.pop %v1559
        %v1564 = vld [vmem:[%s6] sm:$0x7]
        %1566 = vset.pattern.permute.xlu0 0
        %1567 = vperm.xlu0 %1566, %v1564
        %v1568 = vpop.permute.xlu0 %1567
        %v1570 = vlaneseq
        %v1571 = vshrl.u32 %v1570, 7
        %v1572 = vsub.s32 0, %v1571
        %v1573 = vrot.slane %v1560, %v1572
        %v1574 = vlaneseq
        %v1575 = vshrl.u32 %v1574, 7
        %v1576 = vsub.s32 0, %v1575
        %v1577 = vrot.slane %v1561, %v1576
        %v1578 = vlaneseq
        %v1579 = vshrl.u32 %v1578, 7
        %v1580 = vsub.s32 0, %v1579
        %v1581 = vrot.slane %v1562, %v1580
        %v1582 = vlaneseq
        %v1583 = vshrl.u32 %v1582, 7
        %v1584 = vsub.s32 0, %v1583
        %v1585 = vrot.slane %v1563, %v1584
        %v1586 = vmul.f32 %v1568, %v1573
        %v1587 = vmul.f32 %v1568, %v1577
        %v1588 = vmul.f32 %v1568, %v1581
        %v1589 = vmul.f32 %v1568, %v1585
        %1590 = vset.pattern.permute.xlu0 1
        %1591 = vperm.xlu0 %1590, %v1564
        %v1592 = vpop.permute.xlu0 %1591
        %v1594 = vlaneseq
        %v1595 = vshrl.u32 %v1594, 7
        %v1596 = vsub.s32 1, %v1595
        %v1597 = vrot.slane %v1560, %v1596
        %v1598 = vlaneseq
        %v1599 = vshrl.u32 %v1598, 7
        %v1600 = vsub.s32 1, %v1599
        %v1601 = vrot.slane %v1561, %v1600
        %v1602 = vlaneseq
        %v1603 = vshrl.u32 %v1602, 7
        %v1604 = vsub.s32 1, %v1603
        %v1605 = vrot.slane %v1562, %v1604
        %v1606 = vlaneseq
        %v1607 = vshrl.u32 %v1606, 7
        %v1608 = vsub.s32 1, %v1607
        %v1609 = vrot.slane %v1563, %v1608
        %v1610 = vmul.f32 %v1592, %v1597
        %v1611 = vmul.f32 %v1592, %v1601
        %v1612 = vmul.f32 %v1592, %v1605
        %v1613 = vmul.f32 %v1592, %v1609
        %v1614 = vadd.f32 %v1586, %v1610
        %v1615 = vadd.f32 %v1587, %v1611
        %v1616 = vadd.f32 %v1588, %v1612
        %v1617 = vadd.f32 %v1589, %v1613
        %1618 = vset.pattern.permute.xlu0 2
        %1619 = vperm.xlu0 %1618, %v1564
        %v1620 = vpop.permute.xlu0 %1619
        %v1622 = vlaneseq
        %v1623 = vshrl.u32 %v1622, 7
        %v1624 = vsub.s32 2, %v1623
        %v1625 = vrot.slane %v1560, %v1624
        %v1626 = vlaneseq
        %v1627 = vshrl.u32 %v1626, 7
        %v1628 = vsub.s32 2, %v1627
        %v1629 = vrot.slane %v1561, %v1628
        %v1630 = vlaneseq
        %v1631 = vshrl.u32 %v1630, 7
        %v1632 = vsub.s32 2, %v1631
        %v1633 = vrot.slane %v1562, %v1632
        %v1634 = vlaneseq
        %v1635 = vshrl.u32 %v1634, 7
        %v1636 = vsub.s32 2, %v1635
        %v1637 = vrot.slane %v1563, %v1636
        %v1638 = vmul.f32 %v1620, %v1625
        %v1639 = vmul.f32 %v1620, %v1629
        %v1640 = vmul.f32 %v1620, %v1633
        %v1641 = vmul.f32 %v1620, %v1637
        %v1642 = vadd.f32 %v1614, %v1638
        %v1643 = vadd.f32 %v1615, %v1639
        %v1644 = vadd.f32 %v1616, %v1640
        %v1645 = vadd.f32 %v1617, %v1641
        %1646 = vset.pattern.permute.xlu0 3
        %1647 = vperm.xlu0 %1646, %v1564
        %v1648 = vpop.permute.xlu0 %1647
        %v1650 = vlaneseq
        %v1651 = vshrl.u32 %v1650, 7
        %v1652 = vsub.s32 3, %v1651
        %v1653 = vrot.slane %v1560, %v1652
        %v1654 = vlaneseq
        %v1655 = vshrl.u32 %v1654, 7
        %v1656 = vsub.s32 3, %v1655
        %v1657 = vrot.slane %v1561, %v1656
        %v1658 = vlaneseq
        %v1659 = vshrl.u32 %v1658, 7
        %v1660 = vsub.s32 3, %v1659
        %v1661 = vrot.slane %v1562, %v1660
        %v1662 = vlaneseq
        %v1663 = vshrl.u32 %v1662, 7
        %v1664 = vsub.s32 3, %v1663
        %v1665 = vrot.slane %v1563, %v1664
        %v1666 = vmul.f32 %v1648, %v1653
        %v1667 = vmul.f32 %v1648, %v1657
        %v1668 = vmul.f32 %v1648, %v1661
        %v1669 = vmul.f32 %v1648, %v1665
        %v1670 = vadd.f32 %v1642, %v1666
        %v1671 = vadd.f32 %v1643, %v1667
        %v1672 = vadd.f32 %v1644, %v1668
        %v1673 = vadd.f32 %v1645, %v1669
        %1674 = vset.pattern.permute.xlu0 4
        %1675 = vperm.xlu0 %1674, %v1564
        %v1676 = vpop.permute.xlu0 %1675
        %v1678 = vlaneseq
        %v1679 = vshrl.u32 %v1678, 7
        %v1680 = vsub.s32 4, %v1679
        %v1681 = vrot.slane %v1560, %v1680
        %v1682 = vlaneseq
        %v1683 = vshrl.u32 %v1682, 7
        %v1684 = vsub.s32 4, %v1683
        %v1685 = vrot.slane %v1561, %v1684
        %v1686 = vlaneseq
        %v1687 = vshrl.u32 %v1686, 7
        %v1688 = vsub.s32 4, %v1687
        %v1689 = vrot.slane %v1562, %v1688
        %v1690 = vlaneseq
        %v1691 = vshrl.u32 %v1690, 7
        %v1692 = vsub.s32 4, %v1691
        %v1693 = vrot.slane %v1563, %v1692
        %v1694 = vmul.f32 %v1676, %v1681
        %v1695 = vmul.f32 %v1676, %v1685
        %v1696 = vmul.f32 %v1676, %v1689
        %v1697 = vmul.f32 %v1676, %v1693
        %v1698 = vadd.f32 %v1670, %v1694
        %v1699 = vadd.f32 %v1671, %v1695
        %v1700 = vadd.f32 %v1672, %v1696
        %v1701 = vadd.f32 %v1673, %v1697
        %1702 = vset.pattern.permute.xlu0 5
        %1703 = vperm.xlu0 %1702, %v1564
        %v1704 = vpop.permute.xlu0 %1703
        %v1706 = vlaneseq
        %v1707 = vshrl.u32 %v1706, 7
        %v1708 = vsub.s32 5, %v1707
        %v1709 = vrot.slane %v1560, %v1708
        %v1710 = vlaneseq
        %v1711 = vshrl.u32 %v1710, 7
        %v1712 = vsub.s32 5, %v1711
        %v1713 = vrot.slane %v1561, %v1712
        %v1714 = vlaneseq
        %v1715 = vshrl.u32 %v1714, 7
        %v1716 = vsub.s32 5, %v1715
        %v1717 = vrot.slane %v1562, %v1716
        %v1718 = vlaneseq
        %v1719 = vshrl.u32 %v1718, 7
        %v1720 = vsub.s32 5, %v1719
        %v1721 = vrot.slane %v1563, %v1720
        %v1722 = vmul.f32 %v1704, %v1709
        %v1723 = vmul.f32 %v1704, %v1713
        %v1724 = vmul.f32 %v1704, %v1717
        %v1725 = vmul.f32 %v1704, %v1721
        %v1726 = vadd.f32 %v1698, %v1722
        %v1727 = vadd.f32 %v1699, %v1723
        %v1728 = vadd.f32 %v1700, %v1724
        %v1729 = vadd.f32 %v1701, %v1725
        %1730 = vset.pattern.permute.xlu0 6
        %1731 = vperm.xlu0 %1730, %v1564
        %v1732 = vpop.permute.xlu0 %1731
        %v1734 = vlaneseq
        %v1735 = vshrl.u32 %v1734, 7
        %v1736 = vsub.s32 6, %v1735
        %v1737 = vrot.slane %v1560, %v1736
        %v1738 = vlaneseq
        %v1739 = vshrl.u32 %v1738, 7
        %v1740 = vsub.s32 6, %v1739
        %v1741 = vrot.slane %v1561, %v1740
        %v1742 = vlaneseq
        %v1743 = vshrl.u32 %v1742, 7
        %v1744 = vsub.s32 6, %v1743
        %v1745 = vrot.slane %v1562, %v1744
        %v1746 = vlaneseq
        %v1747 = vshrl.u32 %v1746, 7
        %v1748 = vsub.s32 6, %v1747
        %v1749 = vrot.slane %v1563, %v1748
        %v1750 = vmul.f32 %v1732, %v1737
        %v1751 = vmul.f32 %v1732, %v1741
        %v1752 = vmul.f32 %v1732, %v1745
        %v1753 = vmul.f32 %v1732, %v1749
        %v1754 = vadd.f32 %v1726, %v1750
        %v1755 = vadd.f32 %v1727, %v1751
        %v1756 = vadd.f32 %v1728, %v1752
        %v1757 = vadd.f32 %v1729, %v1753
        %1758 = vset.pattern.permute.xlu0 7
        %1759 = vperm.xlu0 %1758, %v1564
        %v1760 = vpop.permute.xlu0 %1759
        %v1762 = vlaneseq
        %v1763 = vshrl.u32 %v1762, 7
        %v1764 = vsub.s32 7, %v1763
        %v1765 = vrot.slane %v1560, %v1764
        %v1766 = vlaneseq
        %v1767 = vshrl.u32 %v1766, 7
        %v1768 = vsub.s32 7, %v1767
        %v1769 = vrot.slane %v1561, %v1768
        %v1770 = vlaneseq
        %v1771 = vshrl.u32 %v1770, 7
        %v1772 = vsub.s32 7, %v1771
        %v1773 = vrot.slane %v1562, %v1772
        %v1774 = vlaneseq
        %v1775 = vshrl.u32 %v1774, 7
        %v1776 = vsub.s32 7, %v1775
        %v1777 = vrot.slane %v1563, %v1776
        %v1778 = vmul.f32 %v1760, %v1765
        %v1779 = vmul.f32 %v1760, %v1769
        %v1780 = vmul.f32 %v1760, %v1773
        %v1781 = vmul.f32 %v1760, %v1777
        %v1782 = vadd.f32 %v1754, %v1778
        %v1783 = vadd.f32 %v1755, %v1779
        %v1784 = vadd.f32 %v1756, %v1780
        %v1785 = vadd.f32 %v1757, %v1781
        %v1786 = vmul.f32 %v1782, 0.5
        %v1787 = vmul.f32 %v1783, 0.5
        %v1788 = vmul.f32 %v1784, 0.5
        %v1789 = vmul.f32 %v1785, 0.5
        %v1790 = vtanh.pop %v1786
        %v1791 = vtanh.pop %v1787
        %v1792 = vtanh.pop %v1788
        %v1793 = vtanh.pop %v1789
        %v1794 = vmul.f32 %v1790, 0.5
        %v1795 = vmul.f32 %v1791, 0.5
        %v1796 = vmul.f32 %v1792, 0.5
        %v1797 = vmul.f32 %v1793, 0.5
        %v1798 = vadd.f32 %v1794, 0.5
        %v1799 = vadd.f32 %v1795, 0.5
        %v1800 = vadd.f32 %v1796, 0.5
        %v1801 = vadd.f32 %v1797, 0.5
        %v1806 = vcombine.low %v1798, %v1799
        %v1807 = vcombine.low %v1800, %v1801
        %1810 = vst [vmem:[%s346] sm:$0x77] %v1806
        %1811 = vst [vmem:[%s346 + $0x8] sm:$0x77] %v1807
        %s1812 = sand.u32 %s192, 1
        %s1813 = scalar_lea.sflag [#allocation4], %s1812
        %s1814 = sand.u32 %s192, 1
        %s1815 = smul.addr %s1814, 16
        %s1816 = scalar_lea.vmem [#allocation8], %s1815
        // Predicated region
        $region61: #{tpu_custom_call.1} parent=47 // pred_check
          %p1817 = pneg %p202
        $region62: #{tpu_custom_call.1} parent=47 // pred_check_branch
          %1819 = sbr.rel (%p1817) target = $region64
        $region63: #{tpu_custom_call.1} parent=47 // pred_region
          %s1820 = smul.u32 4, %s27
          %s1822 = ssub.s32 256, 256
          %1823 = vsyncadd %s1813, %s1822
          %s1824 = smul.addr %s1820, 64
          %s1825 = scalar_lea.hbm %s7, %s1824
          %s1827 = sshll.u32 %s1816, 4
          %s1828 = int_to_ptr.vmem [resolvable:$true] %s1827
          %1830 = dma.vmem_to_hbm [thread:$0]  %s1828, 256, %s1825, %s1813
        $region64: #{tpu_custom_call.1} parent=47 // pred_fallthru
          _
      $region48: #{tpu_custom_call.1} parent=5 // pred_fallthru
        _
      %p1831 = scmp.le.s32.totalorder 2, %s22
      // Predicated region
      $region65: #{tpu_custom_call.1} parent=5 // pred_check
        %p1832 = pneg %p1831
      $region66: #{tpu_custom_call.1} parent=5 // pred_check_branch
        %1834 = sbr.rel (%p1832) target = $region68
      $region67: #{tpu_custom_call.1} parent=5 // pred_region
        %s1835 = ssub.s32 %s22, 2
        // Predicated region
        $region69: #{tpu_custom_call.1} parent=67 // pred_check
          %p1836 = pneg %p208
        $region70: #{tpu_custom_call.1} parent=67 // pred_check_branch
          %1838 = sbr.rel (%p1836) target = $region72
        $region71: #{tpu_custom_call.1} parent=67 // pred_region
          %s1839 = sand.u32 %s193, 1
          %s1840 = scalar_lea.sflag [#allocation4], %s1839
          %s1841 = sand.u32 %s193, 1
          %s1842 = smul.addr %s1841, 16
          %s1843 = scalar_lea.vmem [#allocation8], %s1842
          %1844 = dma.done %s1840, 256
        $region72: #{tpu_custom_call.1} parent=67 // pred_fallthru
          _
      $region68: #{tpu_custom_call.1} parent=5 // pred_fallthru
        _
    $region6: #{tpu_custom_call.1} parent=1 // loop_footer
      %s26 = sadd.s32 1, %s22
    $region7: #{tpu_custom_call.1} parent=1 // loop_footer_branch
      %21 = sbr.rel target = $region3
    $region8: #{tpu_custom_call.1} parent=1 // loop_exit
      _
    %1845 = vsyncpa [#allocation3], 1
    %s1846 = scalar_lea.sflag [#allocation3], 1
    %1847 = vsyncpa %s1846, 1
    %1848 = vsyncpa [#allocation6], 1
    %s1849 = scalar_lea.sflag [#allocation6], 1
    %1850 = vsyncpa %s1849, 1
    %1851 = vsyncpa [#allocation4], 1
    %s1852 = scalar_lea.sflag [#allocation4], 1
    %1853 = vsyncpa %s1852, 1

</llo_original>
